<compile_context>
chip_gen: v7x
topology: tpu7x:2x2x1
jax: 0.10.0
libtpu: 0.0.40
codegen_flags: <defaults>
</compile_context>

<pallas_src>
import jax
import jax.numpy as jnp
from jax.experimental import pallas as pl
from jax.experimental.pallas import tpu as pltpu


def _leaky_relu(x, slope=0.2):
    # max-form: 2 VPU ops per vreg (mul + max) instead of cmp + mul + select.
    return jnp.maximum(x, slope * x)


# ----------------------- Pass 1: BatchNorm batch statistics ------------------
def _stats_kernel(x_ref, w1_ref, b1_ref, w2_ref, ones_ref, stats_ref,
                  sum_acc, sq_acc):
    # x_ref: (Cin, TP)  w1_ref: (C1, Cin)  b1_ref: (C1, 1)  w2_ref: (C2, C1)
    # ones_ref: (TP, 1)  stats_ref: (C2, 2) [col0 = sum, col1 = sumsq]
    # sum_acc / sq_acc: VMEM (C2, 1) accumulators.
    i = pl.program_id(1)

    @pl.when(i == 0)
    def _():
        sum_acc[...] = jnp.zeros_like(sum_acc)
        sq_acc[...] = jnp.zeros_like(sq_acc)

    h1 = jnp.dot(w1_ref[...], x_ref[...],
                 preferred_element_type=jnp.float32) + b1_ref[...]
    h1 = _leaky_relu(h1)
    h2 = jnp.dot(w2_ref[...], h1, preferred_element_type=jnp.float32)

    # Per-channel reductions over pixels done as ones-matvecs on the MXU (which has
    # slack) instead of lane reductions on the saturated VPU/XLU slots.
    sum_acc[...] += jnp.dot(h2, ones_ref[...], preferred_element_type=jnp.float32)
    sq_acc[...] += jnp.dot(h2 * h2, ones_ref[...],
                           preferred_element_type=jnp.float32)

    @pl.when(i == pl.num_programs(1) - 1)
    def _():
        stats_ref[:, 0:1] = sum_acc[...]
        stats_ref[:, 1:2] = sq_acc[...]


# --------------- Pass 2: recompute + BN affine + LeakyReLU + conv3 -----------
def _head_kernel(x_ref, w1_ref, b1_ref, w2s_ref, shift_ref, w3_ref, y_ref):
    # x_ref: (Cin, TP)   w2s_ref: (C2, C1) = (BN scale) * w2 folded on the host
    # shift_ref: (C2, 1) w3_ref: (1, C2)   y_ref: (1, TP)  (lane-dense store)
    h1 = jnp.dot(w1_ref[...], x_ref[...],
                 preferred_element_type=jnp.float32) + b1_ref[...]
    h1 = _leaky_relu(h1)
    h2 = jnp.dot(w2s_ref[...], h1,
                 preferred_element_type=jnp.float32) + shift_ref[...]
    h = _leaky_relu(h2)
    # 1x1 conv to a single channel as an MXU dot (M=1, K=C2, N=TP).
    y_ref[...] = jnp.dot(w3_ref[...], h, preferred_element_type=jnp.float32)


# ----------------------------- Wrapper ---------------------------------------
def _pick_tile(hw, tile_max):
    if hw <= tile_max:
        return hw                      # full-extent last dim is always legal
    t = (tile_max // 128) * 128
    while t >= 128:
        if hw % t == 0:
            return t
        t -= 128
    # TODO(synk): pad ragged spatial sizes (with masked BN contribution) instead of
    # requiring divisibility.
    raise ValueError(f"H*W={hw} has no 128-multiple tile <= {tile_max}")


_VMEM_LIMIT = 48 * 1024 * 1024   # big tiles on v5e (16 MiB scoped default), headroom on v7x


def pixel_discriminator(x_nchw, params, *, tile_p=8192, eps=1e-5):
    w1, b1, w2 = params["w1"], params["b1"], params["w2"]
    gamma, beta, w3 = params["gamma"], params["beta"], params["w3"]
    N, Cin, H, W = x_nchw.shape
    C1, C2 = w1.shape[0], w2.shape[0]
    HW = H * W
    tp = _pick_tile(HW, tile_p)
    n_tiles = HW // tp

    x = x_nchw.reshape(N, Cin, HW).astype(jnp.float32)   # pure view, no transpose
    b1c = b1.reshape(C1, 1)
    w3r = w3.reshape(1, C2)
    ones = jnp.ones((tp, 1), jnp.float32)                 # resident RHS for MXU reductions

    rep = lambda n, i: (0, 0)   # broadcast weights across the grid

    # ---- Pass 1: per-batch-row partial sum / sumsq of the conv2 activations ----
    stats = pl.pallas_call(
        _stats_kernel,
        out_shape=jax.ShapeDtypeStruct((N, C2, 2), jnp.float32),
        grid_spec=pltpu.PrefetchScalarGridSpec(
            num_scalar_prefetch=0,
            grid=(N, n_tiles),
            in_specs=[
                pl.BlockSpec((None, Cin, tp), lambda n, i: (n, 0, i)),
                pl.BlockSpec((C1, Cin), rep),
                pl.BlockSpec((C1, 1), rep),
                pl.BlockSpec((C2, C1), rep),
                pl.BlockSpec((tp, 1), rep),
            ],
            out_specs=pl.BlockSpec((None, C2, 2), lambda n, i: (n, 0, 0)),
            scratch_shapes=[pltpu.VMEM((C2, 1), jnp.float32),
                            pltpu.VMEM((C2, 1), jnp.float32)],
        ),
        compiler_params=pltpu.CompilerParams(
            dimension_semantics=("parallel", "arbitrary"),
            vmem_limit_bytes=_VMEM_LIMIT),
    )(x, w1, b1c, w2, ones)

    # ---- Finalize training-mode BatchNorm batch stats -> per-channel affine ----
    P = N * HW
    total = jnp.sum(stats, axis=0)                # (C2, 2) combine per-n partials
    mean = total[:, 0] / P
    var = total[:, 1] / P - mean * mean           # biased variance (BN training mode)
    inv_std = jax.lax.rsqrt(var + eps)
    scale = gamma * inv_std                       # (C2,)
    shift = beta - mean * scale                   # (C2,)
    w2_eff = scale[:, None] * w2                  # fold BN scale into conv2 weights
    shiftc = shift.reshape(C2, 1)

    # ---- Pass 2: recompute h1/h2 from x, apply folded BN + LeakyReLU + conv3 ---
    y = pl.pallas_call(
        _head_kernel,
        out_shape=jax.ShapeDtypeStruct((N, 1, HW), jnp.float32),
        grid_spec=pltpu.PrefetchScalarGridSpec(
            num_scalar_prefetch=0,
            grid=(N, n_tiles),
            in_specs=[
                pl.BlockSpec((None, Cin, tp), lambda n, i: (n, 0, i)),
                pl.BlockSpec((C1, Cin), rep),
                pl.BlockSpec((C1, 1), rep),
                pl.BlockSpec((C2, C1), rep),
                pl.BlockSpec((C2, 1), rep),
                pl.BlockSpec((1, C2), rep),
            ],
            out_specs=pl.BlockSpec((None, 1, tp), lambda n, i: (n, 0, i)),
        ),
        compiler_params=pltpu.CompilerParams(
            dimension_semantics=("parallel", "parallel"),
            vmem_limit_bytes=_VMEM_LIMIT),
    )(x, w1, b1c, w2_eff, shiftc, w3r)

    return y.reshape(N, 1, H, W)                  # pure reshape back to NCHW


# ----------------------------- Pure-JAX reference ----------------------------
def reference(x_nchw, params, eps=1e-5):
    w1, b1, w2 = params["w1"], params["b1"], params["w2"]
    gamma, beta, w3 = params["gamma"], params["beta"], params["w3"]
    N, Cin, H, W = x_nchw.shape
    x = jnp.moveaxis(x_nchw.reshape(N, Cin, H * W), 1, 2).reshape(-1, Cin)
    h1 = x @ w1.T + b1
    h1 = jnp.where(h1 > 0, h1, 0.2 * h1)
    h2 = h1 @ w2.T
    mean = h2.mean(axis=0)
    var = h2.var(axis=0)                          # biased, training-mode BN
    hn = (h2 - mean) / jnp.sqrt(var + eps) * gamma + beta
    hn = jnp.where(hn > 0, hn, 0.2 * hn)
    y = hn @ w3.T                                 # (P, 1)
    return y.reshape(N, H * W).reshape(N, 1, H, W)


# ----------------------------- Main ------------------------------------------
if __name__ == "__main__":
    input_nc, ndf = 4, 64
    N, H, W = 2, 16, 16
    C1, C2 = ndf, 2 * ndf

    key = jax.random.PRNGKey(0)
    kx, k1, kb1, k2, kg, kb, k3 = jax.random.split(key, 7)

    params = {
        # 1x1 conv weights stored as (C_out, C_in) matrices (== squeezed PyTorch layout)
        "w1": 0.1 * jax.random.normal(k1, (C1, input_nc), jnp.float32),
        "b1": 0.1 * jax.random.normal(kb1, (C1,), jnp.float32),
        "w2": 0.1 * jax.random.normal(k2, (C2, C1), jnp.float32),
        "gamma": 1.0 + 0.1 * jax.random.normal(kg, (C2,), jnp.float32),
        "beta": 0.1 * jax.random.normal(kb, (C2,), jnp.float32),
        "w3": 0.1 * jax.random.normal(k3, (1, C2), jnp.float32),
    }

    x = jax.random.normal(kx, (N, input_nc, H, W), jnp.float32)

    out = jax.block_until_ready(pixel_discriminator(x, params))
    ref = jax.block_until_ready(reference(x, params))

    assert out.shape == (N, 1, H, W), out.shape
    assert jnp.allclose(out, ref, rtol=1e-3, atol=1e-3), (
        float(jnp.max(jnp.abs(out - ref))))

    print("KERNEL_OK")
</pallas_src>

<mosaic_0001>
module attributes {stable_mosaic.version = 11 : i64} {
  func.func @_stats_kernel(%arg0: i32, %arg1: i32, %arg2: memref<1x4x256xf32, #tpu.memory_space<vmem>>, %arg3: memref<64x4xf32, #tpu.memory_space<vmem>>, %arg4: memref<64x1xf32, #tpu.memory_space<vmem>>, %arg5: memref<128x64xf32, #tpu.memory_space<vmem>>, %arg6: memref<256x1xf32, #tpu.memory_space<vmem>>, %arg7: memref<1x128x2xf32, #tpu.memory_space<vmem>>, %arg8: memref<128x1xf32, #tpu.memory_space<vmem>>, %arg9: memref<128x1xf32, #tpu.memory_space<vmem>>) attributes {dimension_semantics = [#tpu.dimension_semantics<parallel>, #tpu.dimension_semantics<arbitrary>], iteration_bounds = array<i64: 2, 1>, scalar_prefetch = 0 : i64, scratch_operands = 2 : i64, tpu.core_type = #tpu.core_type<tc>, window_params = [{transform_indices = @transform_0, window_bounds = array<i64: 1, 4, 256>}, {pipeline_mode = #tpu.pipeline_mode<synchronous>, transform_indices = @transform_1, window_bounds = array<i64: 64, 4>}, {pipeline_mode = #tpu.pipeline_mode<synchronous>, transform_indices = @transform_2, window_bounds = array<i64: 64, 1>}, {pipeline_mode = #tpu.pipeline_mode<synchronous>, transform_indices = @transform_3, window_bounds = array<i64: 128, 64>}, {pipeline_mode = #tpu.pipeline_mode<synchronous>, transform_indices = @transform_4, window_bounds = array<i64: 256, 1>}, {transform_indices = @transform_5, window_bounds = array<i64: 1, 128, 2>}]} {
    %c0_i32 = arith.constant 0 : i32
    %0 = arith.cmpi eq, %arg1, %c0_i32 : i32
    %1 = arith.extui %0 : i1 to i32
    %c0_i32_0 = arith.constant 0 : i32
    %2 = arith.cmpi ne, %1, %c0_i32_0 : i32
    scf.if %2 {
      %cst_27 = arith.constant 0.000000e+00 : f32
      %29 = vector.broadcast %cst_27 : f32 to vector<128x1xf32>
      %c0_28 = arith.constant 0 : index
      %c0_29 = arith.constant 0 : index
      %30 = vector.load %arg8[%c0_28, %c0_29] : memref<128x1xf32, #tpu.memory_space<vmem>>, vector<128x1xf32>
      tpu.vector_store %arg8[%c0_28, %c0_29], %29 {strides = array<i32>} : memref<128x1xf32, #tpu.memory_space<vmem>>, vector<128x1xf32>,
      %cst_30 = arith.constant 0.000000e+00 : f32
      %31 = vector.broadcast %cst_30 : f32 to vector<128x1xf32>
      %c0_31 = arith.constant 0 : index
      %c0_32 = arith.constant 0 : index
      %32 = vector.load %arg9[%c0_31, %c0_32] : memref<128x1xf32, #tpu.memory_space<vmem>>, vector<128x1xf32>
      tpu.vector_store %arg9[%c0_31, %c0_32], %31 {strides = array<i32>} : memref<128x1xf32, #tpu.memory_space<vmem>>, vector<128x1xf32>,
    } else {
    }
    %c0 = arith.constant 0 : index
    %c0_1 = arith.constant 0 : index
    %3 = vector.load %arg3[%c0, %c0_1] : memref<64x4xf32, #tpu.memory_space<vmem>>, vector<64x4xf32>
    %c0_2 = arith.constant 0 : index
    %c0_3 = arith.constant 0 : index
    %c0_4 = arith.constant 0 : index
    %4 = vector.load %arg2[%c0_2, %c0_3, %c0_4] : memref<1x4x256xf32, #tpu.memory_space<vmem>>, vector<1x4x256xf32>
    %5 = vector.shape_cast %4 : vector<1x4x256xf32> to vector<4x256xf32>
    %cst = arith.constant dense<0.000000e+00> : vector<64x256xf32>
    %6 = tpu.matmul %3, %5, %cst {dimension_numbers = #tpu.dot_dimension_numbers<[1], [0], [0], [1], [0, 0, 1, 1], [], []>} : vector<64x4xf32>, vector<4x256xf32>, vector<64x256xf32> -> vector<64x256xf32>
    %c0_5 = arith.constant 0 : index
    %c0_6 = arith.constant 0 : index
    %7 = vector.load %arg4[%c0_5, %c0_6] : memref<64x1xf32, #tpu.memory_space<vmem>>, vector<64x1xf32>
    %8 = vector.broadcast %7 : vector<64x1xf32> to vector<64x256xf32>
    %9 = arith.addf %6, %8 : vector<64x256xf32>
    %cst_7 = arith.constant 2.000000e-01 : f32
    %10 = vector.broadcast %cst_7 : f32 to vector<64x256xf32>
    %11 = arith.mulf %10, %9 : vector<64x256xf32>
    %12 = arith.maximumf %9, %11 : vector<64x256xf32>
    %c0_8 = arith.constant 0 : index
    %c0_9 = arith.constant 0 : index
    %13 = vector.load %arg5[%c0_8, %c0_9] : memref<128x64xf32, #tpu.memory_space<vmem>>, vector<128x64xf32>
    %cst_10 = arith.constant dense<0.000000e+00> : vector<128x256xf32>
    %14 = tpu.matmul %13, %12, %cst_10 {dimension_numbers = #tpu.dot_dimension_numbers<[1], [0], [0], [1], [0, 0, 1, 1], [], []>} : vector<128x64xf32>, vector<64x256xf32>, vector<128x256xf32> -> vector<128x256xf32>
    %c0_11 = arith.constant 0 : index
    %c0_12 = arith.constant 0 : index
    %15 = vector.load %arg8[%c0_11, %c0_12] : memref<128x1xf32, #tpu.memory_space<vmem>>, vector<128x1xf32>
    %c0_13 = arith.constant 0 : index
    %c0_14 = arith.constant 0 : index
    %16 = vector.load %arg6[%c0_13, %c0_14] : memref<256x1xf32, #tpu.memory_space<vmem>>, vector<256x1xf32>
    %cst_15 = arith.constant dense<0.000000e+00> : vector<128x1xf32>
    %17 = tpu.matmul %14, %16, %cst_15 {dimension_numbers = #tpu.dot_dimension_numbers<[1], [0], [0], [1], [0, 0, 1, 1], [], []>} : vector<128x256xf32>, vector<256x1xf32>, vector<128x1xf32> -> vector<128x1xf32>
    %18 = arith.addf %15, %17 : vector<128x1xf32>
    %c0_16 = arith.constant 0 : index
    %c0_17 = arith.constant 0 : index
    %19 = vector.load %arg8[%c0_16, %c0_17] : memref<128x1xf32, #tpu.memory_space<vmem>>, vector<128x1xf32>
    tpu.vector_store %arg8[%c0_16, %c0_17], %18 {strides = array<i32>} : memref<128x1xf32, #tpu.memory_space<vmem>>, vector<128x1xf32>,
    %c0_18 = arith.constant 0 : index
    %c0_19 = arith.constant 0 : index
    %20 = vector.load %arg9[%c0_18, %c0_19] : memref<128x1xf32, #tpu.memory_space<vmem>>, vector<128x1xf32>
    %21 = arith.mulf %14, %14 : vector<128x256xf32>
    %c0_20 = arith.constant 0 : index
    %c0_21 = arith.constant 0 : index
    %22 = vector.load %arg6[%c0_20, %c0_21] : memref<256x1xf32, #tpu.memory_space<vmem>>, vector<256x1xf32>
    %cst_22 = arith.constant dense<0.000000e+00> : vector<128x1xf32>
    %23 = tpu.matmul %21, %22, %cst_22 {dimension_numbers = #tpu.dot_dimension_numbers<[1], [0], [0], [1], [0, 0, 1, 1], [], []>} : vector<128x256xf32>, vector<256x1xf32>, vector<128x1xf32> -> vector<128x1xf32>
    %24 = arith.addf %20, %23 : vector<128x1xf32>
    %c0_23 = arith.constant 0 : index
    %c0_24 = arith.constant 0 : index
    %25 = vector.load %arg9[%c0_23, %c0_24] : memref<128x1xf32, #tpu.memory_space<vmem>>, vector<128x1xf32>
    tpu.vector_store %arg9[%c0_23, %c0_24], %24 {strides = array<i32>} : memref<128x1xf32, #tpu.memory_space<vmem>>, vector<128x1xf32>,
    %c0_i32_25 = arith.constant 0 : i32
    %26 = arith.cmpi eq, %arg1, %c0_i32_25 : i32
    %27 = arith.extui %26 : i1 to i32
    %c0_i32_26 = arith.constant 0 : i32
    %28 = arith.cmpi ne, %27, %c0_i32_26 : i32
    scf.if %28 {
      %c0_27 = arith.constant 0 : index
      %c0_28 = arith.constant 0 : index
      %29 = vector.load %arg8[%c0_27, %c0_28] : memref<128x1xf32, #tpu.memory_space<vmem>>, vector<128x1xf32>
      %c0_29 = arith.constant 0 : index
      %c0_30 = arith.constant 0 : index
      %c0_31 = arith.constant 0 : index
      %30 = vector.load %arg7[%c0_29, %c0_30, %c0_31] : memref<1x128x2xf32, #tpu.memory_space<vmem>>, vector<1x128x1xf32>
      %31 = vector.shape_cast %30 : vector<1x128x1xf32> to vector<128x1xf32>
      %32 = vector.shape_cast %29 : vector<128x1xf32> to vector<1x128x1xf32>
      tpu.vector_store %arg7[%c0_29, %c0_30, %c0_31], %32 {strides = array<i32>} : memref<1x128x2xf32, #tpu.memory_space<vmem>>, vector<1x128x1xf32>,
      %c0_32 = arith.constant 0 : index
      %c0_33 = arith.constant 0 : index
      %33 = vector.load %arg9[%c0_32, %c0_33] : memref<128x1xf32, #tpu.memory_space<vmem>>, vector<128x1xf32>
      %c0_34 = arith.constant 0 : index
      %c0_35 = arith.constant 0 : index
      %c1 = arith.constant 1 : index
      %34 = vector.load %arg7[%c0_34, %c0_35, %c1] : memref<1x128x2xf32, #tpu.memory_space<vmem>>, vector<1x128x1xf32>
      %35 = vector.shape_cast %34 : vector<1x128x1xf32> to vector<128x1xf32>
      %36 = vector.shape_cast %33 : vector<128x1xf32> to vector<1x128x1xf32>
      tpu.vector_store %arg7[%c0_34, %c0_35, %c1], %36 {strides = array<i32>} : memref<1x128x2xf32, #tpu.memory_space<vmem>>, vector<1x128x1xf32>,
    } else {
    }
    return
  }
  func.func @transform_0(%arg0: i32, %arg1: i32) -> (i32, i32, i32) {
    %c0_i32 = arith.constant 0 : i32
    %c0_i32_0 = arith.constant 0 : i32
    return %arg0, %c0_i32, %arg1 : i32, i32, i32
  }
  func.func @transform_1(%arg0: i32, %arg1: i32) -> (i32, i32) {
    %c0_i32 = arith.constant 0 : i32
    %c0_i32_0 = arith.constant 0 : i32
    %c0_i32_1 = arith.constant 0 : i32
    return %c0_i32, %c0_i32_0 : i32, i32
  }
  func.func @transform_2(%arg0: i32, %arg1: i32) -> (i32, i32) {
    %c0_i32 = arith.constant 0 : i32
    %c0_i32_0 = arith.constant 0 : i32
    %c0_i32_1 = arith.constant 0 : i32
    return %c0_i32, %c0_i32_0 : i32, i32
  }
  func.func @transform_3(%arg0: i32, %arg1: i32) -> (i32, i32) {
    %c0_i32 = arith.constant 0 : i32
    %c0_i32_0 = arith.constant 0 : i32
    %c0_i32_1 = arith.constant 0 : i32
    return %c0_i32, %c0_i32_0 : i32, i32
  }
  func.func @transform_4(%arg0: i32, %arg1: i32) -> (i32, i32) {
    %c0_i32 = arith.constant 0 : i32
    %c0_i32_0 = arith.constant 0 : i32
    %c0_i32_1 = arith.constant 0 : i32
    return %c0_i32, %c0_i32_0 : i32, i32
  }
  func.func @transform_5(%arg0: i32, %arg1: i32) -> (i32, i32, i32) {
    %c0_i32 = arith.constant 0 : i32
    %c0_i32_0 = arith.constant 0 : i32
    %c0_i32_1 = arith.constant 0 : i32
    return %arg0, %c0_i32, %c0_i32_0 : i32, i32, i32
  }
}

</mosaic_0001>

<llo_original>
// kernel: tpu_custom_call.1
$region0: #{tpu_custom_call.1}
  #allocation0 [shape = 'u32[]', space=smem, size = 0x4, offset = 0x4, fixed_abs, tag = 'smem constant byte address 0x4 - core index']
  #allocation1 [shape = 'u32[144,128]{1,0:T(1,128)}', space=vmem, size = 0x12000, scoped, tag = 'internal scratch']
  #allocation2 [shape = 'f32[128,1]{1,0:T(8,128)}', space=vmem, size = 0x10000, scoped, tag = 'scratch operand']
  #allocation3 [shape = 'f32[128,1]{1,0:T(8,128)}', space=vmem, size = 0x10000, scoped, tag = 'scratch operand']
  %s0 = inlined_call_operand.vmem [shape: f32[2,4,256], index: 0, kind: input, shape index: {}]
  %s1 = inlined_call_operand.vmem [shape: f32[64,4], index: 1, kind: input, shape index: {}]
  %s2 = inlined_call_operand.vmem [shape: f32[64,1], index: 2, kind: input, shape index: {}]
  %s3 = inlined_call_operand.vmem [shape: f32[128,64], index: 3, kind: input, shape index: {}]
  %s4 = inlined_call_operand.vmem [shape: f32[256,1], index: 4, kind: input, shape index: {}]
  %s5 = inlined_call_operand.vmem [shape: f32[2,128,2], index: 5, kind: output, shape index: {}]
  %s6 = sld [smem:[#allocation0]]
  $region61: #{tpu_custom_call.1} parent=0
    _
  %s8 = ssub.s32 1, %s6
  %s9 = scalar_select 0, %s8, %s6
  loop: start=0, step=1, limit=4
  $region2: #{tpu_custom_call.1} parent=0 // loop_pre_header
    _
  $region3: #{tpu_custom_call.1} parent=0 // loop_header
    %s11 = sphi 0, %s15
    %p12 = scmp.ge.s32.totalorder %s11, 4
    %s18 = sphi 0, %s30
    %s19 = sphi 0, %s26
    %s20 = sphi 0, %s18
    %s21 = sphi 0, %s19
    %s22 = sphi 0, %s20
    %s23 = sphi 0, %s21
    %s35 = sphi 0, %s37
    %s38 = sphi 0, %s35
    %s39 = sphi 0, %s38
    %s55 = sphi 0, %s39
    %s59 = sphi 0, %s59
    %s61 = sphi 0, %s59
    %s62 = sphi 0, %s61
    %s76 = sphi 0, %s62
    %s80 = sphi 0, %s80
    %s82 = sphi 0, %s80
    %s83 = sphi 0, %s82
    %s97 = sphi 0, %s83
    %s101 = sphi 0, %s101
    %s103 = sphi 0, %s101
    %s104 = sphi 0, %s103
    %s118 = sphi 0, %s104
    %s122 = sphi 0, %s122
    %s124 = sphi 0, %s122
    %s125 = sphi 0, %s124
    %s139 = sphi 0, %s125
    %s145 = sphi 0, %s147
    %s148 = sphi 0, %s145
    %s149 = sphi 0, %s148
    %s165 = sphi 0, %s149
  $region4: #{tpu_custom_call.1} parent=0 // loop_header_branch
    %14 = sbr.rel (%p12) target = $region8
  $region5: #{tpu_custom_call.1} parent=0 // loop_body
    %s16 = ssub.s32 %s11, 1
    %s17 = ssub.s32 %s11, 2
    %s24 = sadd.s32 1, %s19
    %p25 = scmp.ge.s32.totalorder %s24, 1
    %s26 = scalar_select %p25, 0, %s24
    %s27 = sadd.s32 1, %s18
    %s28 = scalar_select %p25, %s27, %s18
    %p29 = scmp.ge.s32.totalorder %s28, 2
    %s30 = scalar_select %p29, 0, %s28
    %s31 = ssub.s32 %s18, %s30
    %s32 = ssub.s32 %s19, %s26
    %s33 = sor.u32 %s31, %s32
    %p34 = scmp.eq.s32.totalorder %s33, 0
    %s36 = sadd.s32 %s35, 1
    %s37 = scalar_select %p34, %s35, %s36
    %p40 = pneg %p34
    %p41 = scmp.eq.s32.totalorder %s11, 1
    %p42 = por %p40, %p41
    %p43 = scmp.ne.s32.totalorder %s35, %s38
    %p44 = scmp.eq.s32.totalorder %s11, 0
    %p45 = por %p43, %p44
    %p46 = scmp.ne.s32.totalorder %s35, %s38
    %p47 = scmp.eq.s32.totalorder %s16, 1
    %p48 = por %p46, %p47
    %p49 = scmp.ne.s32.totalorder %s38, %s39
    %p50 = scmp.eq.s32.totalorder %s16, 0
    %p51 = por %p49, %p50
    %p52 = scmp.ne.s32.totalorder %s38, %s39
    %p53 = scmp.eq.s32.totalorder %s17, 1
    %p54 = por %p52, %p53
    %p56 = scmp.ne.s32.totalorder %s39, %s55
    %p57 = scmp.eq.s32.totalorder %s17, 0
    %p58 = por %p56, %p57
    %s60 = sadd.s32 %s59, 1
    %p63 = scmp.eq.s32.totalorder %s11, 1
    %p64 = scmp.ne.s32.totalorder %s59, %s61
    %p65 = scmp.eq.s32.totalorder %s11, 0
    %p66 = por %p64, %p65
    %p67 = scmp.ne.s32.totalorder %s59, %s61
    %p68 = scmp.eq.s32.totalorder %s16, 1
    %p69 = por %p67, %p68
    %p70 = scmp.ne.s32.totalorder %s61, %s62
    %p71 = scmp.eq.s32.totalorder %s16, 0
    %p72 = por %p70, %p71
    %p73 = scmp.ne.s32.totalorder %s61, %s62
    %p74 = scmp.eq.s32.totalorder %s17, 1
    %p75 = por %p73, %p74
    %p77 = scmp.ne.s32.totalorder %s62, %s76
    %p78 = scmp.eq.s32.totalorder %s17, 0
    %p79 = por %p77, %p78
    %s81 = sadd.s32 %s80, 1
    %p84 = scmp.eq.s32.totalorder %s11, 1
    %p85 = scmp.ne.s32.totalorder %s80, %s82
    %p86 = scmp.eq.s32.totalorder %s11, 0
    %p87 = por %p85, %p86
    %p88 = scmp.ne.s32.totalorder %s80, %s82
    %p89 = scmp.eq.s32.totalorder %s16, 1
    %p90 = por %p88, %p89
    %p91 = scmp.ne.s32.totalorder %s82, %s83
    %p92 = scmp.eq.s32.totalorder %s16, 0
    %p93 = por %p91, %p92
    %p94 = scmp.ne.s32.totalorder %s82, %s83
    %p95 = scmp.eq.s32.totalorder %s17, 1
    %p96 = por %p94, %p95
    %p98 = scmp.ne.s32.totalorder %s83, %s97
    %p99 = scmp.eq.s32.totalorder %s17, 0
    %p100 = por %p98, %p99
    %s102 = sadd.s32 %s101, 1
    %p105 = scmp.eq.s32.totalorder %s11, 1
    %p106 = scmp.ne.s32.totalorder %s101, %s103
    %p107 = scmp.eq.s32.totalorder %s11, 0
    %p108 = por %p106, %p107
    %p109 = scmp.ne.s32.totalorder %s101, %s103
    %p110 = scmp.eq.s32.totalorder %s16, 1
    %p111 = por %p109, %p110
    %p112 = scmp.ne.s32.totalorder %s103, %s104
    %p113 = scmp.eq.s32.totalorder %s16, 0
    %p114 = por %p112, %p113
    %p115 = scmp.ne.s32.totalorder %s103, %s104
    %p116 = scmp.eq.s32.totalorder %s17, 1
    %p117 = por %p115, %p116
    %p119 = scmp.ne.s32.totalorder %s104, %s118
    %p120 = scmp.eq.s32.totalorder %s17, 0
    %p121 = por %p119, %p120
    %s123 = sadd.s32 %s122, 1
    %p126 = scmp.eq.s32.totalorder %s11, 1
    %p127 = scmp.ne.s32.totalorder %s122, %s124
    %p128 = scmp.eq.s32.totalorder %s11, 0
    %p129 = por %p127, %p128
    %p130 = scmp.ne.s32.totalorder %s122, %s124
    %p131 = scmp.eq.s32.totalorder %s16, 1
    %p132 = por %p130, %p131
    %p133 = scmp.ne.s32.totalorder %s124, %s125
    %p134 = scmp.eq.s32.totalorder %s16, 0
    %p135 = por %p133, %p134
    %p136 = scmp.ne.s32.totalorder %s124, %s125
    %p137 = scmp.eq.s32.totalorder %s17, 1
    %p138 = por %p136, %p137
    %p140 = scmp.ne.s32.totalorder %s125, %s139
    %p141 = scmp.eq.s32.totalorder %s17, 0
    %p142 = por %p140, %p141
    %s143 = ssub.s32 %s18, %s30
    %p144 = scmp.eq.s32.totalorder %s143, 0
    %s146 = sadd.s32 %s145, 1
    %s147 = scalar_select %p144, %s145, %s146
    %p150 = pneg %p144
    %p151 = scmp.eq.s32.totalorder %s11, 1
    %p152 = por %p150, %p151
    %p153 = scmp.ne.s32.totalorder %s145, %s148
    %p154 = scmp.eq.s32.totalorder %s11, 0
    %p155 = por %p153, %p154
    %p156 = scmp.ne.s32.totalorder %s145, %s148
    %p157 = scmp.eq.s32.totalorder %s16, 1
    %p158 = por %p156, %p157
    %p159 = scmp.ne.s32.totalorder %s148, %s149
    %p160 = scmp.eq.s32.totalorder %s16, 0
    %p161 = por %p159, %p160
    %p162 = scmp.ne.s32.totalorder %s148, %s149
    %p163 = scmp.eq.s32.totalorder %s17, 1
    %p164 = por %p162, %p163
    %p166 = scmp.ne.s32.totalorder %s149, %s165
    %p167 = scmp.eq.s32.totalorder %s17, 0
    %p168 = por %p166, %p167
    %p169 = scmp.le.s32.totalorder 1, %s11
    %p170 = scmp.lt.s32.totalorder %s11, 3
    %p171 = pnand %p169, %p170
    %p172 = pneg %p171
    // Predicated region
    $region9: #{tpu_custom_call.1} parent=5 // pred_check
      _
    $region10: #{tpu_custom_call.1} parent=5 // pred_check_branch
      %174 = sbr.rel (%p171) target = $region12
    $region11: #{tpu_custom_call.1} parent=5 // pred_region
      %s175 = ssub.s32 %s11, 1
      // Predicated region
      $region13: #{tpu_custom_call.1} parent=11 // pred_check
        %p176 = pneg %p72
      $region14: #{tpu_custom_call.1} parent=11 // pred_check_branch
        %178 = sbr.rel (%p176) target = $region16
      $region15: #{tpu_custom_call.1} parent=11 // pred_region
        _
      $region16: #{tpu_custom_call.1} parent=11 // pred_fallthru
        _
      // Predicated region
      $region17: #{tpu_custom_call.1} parent=11 // pred_check
        %p179 = pneg %p93
      $region18: #{tpu_custom_call.1} parent=11 // pred_check_branch
        %181 = sbr.rel (%p179) target = $region20
      $region19: #{tpu_custom_call.1} parent=11 // pred_region
        _
      $region20: #{tpu_custom_call.1} parent=11 // pred_fallthru
        _
      // Predicated region
      $region21: #{tpu_custom_call.1} parent=11 // pred_check
        %p182 = pneg %p114
      $region22: #{tpu_custom_call.1} parent=11 // pred_check_branch
        %184 = sbr.rel (%p182) target = $region24
      $region23: #{tpu_custom_call.1} parent=11 // pred_region
        _
      $region24: #{tpu_custom_call.1} parent=11 // pred_fallthru
        _
      // Predicated region
      $region25: #{tpu_custom_call.1} parent=11 // pred_check
        %p185 = pneg %p135
      $region26: #{tpu_custom_call.1} parent=11 // pred_check_branch
        %187 = sbr.rel (%p185) target = $region28
      $region27: #{tpu_custom_call.1} parent=11 // pred_region
        _
      $region28: #{tpu_custom_call.1} parent=11 // pred_fallthru
        _
    $region12: #{tpu_custom_call.1} parent=5 // pred_fallthru
      _
    %p188 = scmp.lt.s32.totalorder %s11, 2
    // Predicated region
    $region29: #{tpu_custom_call.1} parent=5 // pred_check
      %p189 = pneg %p188
    $region30: #{tpu_custom_call.1} parent=5 // pred_check_branch
      %191 = sbr.rel (%p189) target = $region32
    $region31: #{tpu_custom_call.1} parent=5 // pred_region
      // Predicated region
      $region33: #{tpu_custom_call.1} parent=31 // pred_check
        %p192 = pneg %p45
      $region34: #{tpu_custom_call.1} parent=31 // pred_check_branch
        %194 = sbr.rel (%p192) target = $region36
      $region35: #{tpu_custom_call.1} parent=31 // pred_region
        %s195 = smul.u32 2, %s19
        %p196 = scmp.lt.s32.totalorder %s18, 1
        %s197 = scalar_select %p196, %s18, 1
        %p198 = scmp.lt.s32.totalorder %s195, 1
        %s199 = scalar_select %p198, %s195, 1
        %s200 = smul.addr %s197, 2
        %s201 = sadd.s32 %s199, %s200
        %s202 = smul.addr %s201, 4
        %s203 = scalar_lea.vmem %s0, %s202
        %s204 = smul.u32 2, %s19
      $region36: #{tpu_custom_call.1} parent=31 // pred_fallthru
        _
    $region32: #{tpu_custom_call.1} parent=5 // pred_fallthru
      _
    %p205 = scmp.le.s32.totalorder 1, %s11
    %p206 = scmp.lt.s32.totalorder %s11, 3
    %p207 = pnand %p205, %p206
    %p208 = pneg %p207
    // Predicated region
    $region37: #{tpu_custom_call.1} parent=5 // pred_check
      _
    $region38: #{tpu_custom_call.1} parent=5 // pred_check_branch
      %210 = sbr.rel (%p207) target = $region40
    $region39: #{tpu_custom_call.1} parent=5 // pred_region
      %s211 = ssub.s32 %s11, 1
      %s212 = smul.u32 2, %s21
      %p213 = scmp.lt.s32.totalorder %s20, 1
      %s214 = scalar_select %p213, %s20, 1
      %p215 = scmp.lt.s32.totalorder %s212, 1
      %s216 = scalar_select %p215, %s212, 1
      %s217 = smul.addr %s214, 2
      %s218 = sadd.s32 %s216, %s217
      %s219 = smul.addr %s218, 4
      %s220 = scalar_lea.vmem %s0, %s219
      %p221 = pneg %p51
      %p222 = pneg %p48
      %p223 = pneg %p72
      %p224 = pneg %p69
      %p225 = pneg %p93
      %p226 = pneg %p90
      %p227 = pneg %p114
      %p228 = pneg %p111
      %p229 = pneg %p135
      %p230 = pneg %p132
      %p231 = pneg %p161
      %p232 = pneg %p158
      %p233 = scmp.lt.s32.totalorder %s20, 1
      %s234 = scalar_select %p233, %s20, 1
      %s235 = smul.addr %s234, 16
      %s236 = smul.addr %s235, 8
      %s237 = scalar_lea.vmem %s5, %s236
      %s238 = smul.u32 2, %s21
      %p239 = scmp.lt.s32.totalorder %s20, 1
      %s240 = scalar_select %p239, %s20, 1
      %p241 = scmp.lt.s32.totalorder %s238, 1
      %s242 = scalar_select %p241, %s238, 1
      %s243 = smul.addr %s240, 2
      %s244 = sadd.s32 %s242, %s243
      %s245 = smul.addr %s244, 4
      %s246 = scalar_lea.vmem %s0, %s245
      %s247 = smul.u32 2, %s21
      %p248 = scmp.lt.s32.totalorder %s20, 1
      %s249 = scalar_select %p248, %s20, 1
      %s250 = smul.addr %s249, 16
      %s251 = smul.addr %s250, 8
      %s252 = scalar_lea.vmem %s5, %s251
      %p253 = scmp.eq.s32.totalorder %s21, 0
      // Predicated region
      $region41: #{tpu_custom_call.1} parent=39 // pred_check
        %p254 = pneg %p253
      $region42: #{tpu_custom_call.1} parent=39 // pred_check_branch
        %256 = sbr.rel (%p254) target = $region44
      $region43: #{tpu_custom_call.1} parent=39 // pred_region
        %vm257 = vcmask 7168
        %258 = vst.msk [vmem:[#allocation2] sm:$0xff] %vm257, 0.0
        %259 = vst.msk [vmem:[#allocation2 + $0x8] sm:$0xff] %vm257, 0.0
        %260 = vst.msk [vmem:[#allocation2 + $0x10] sm:$0xff] %vm257, 0.0
        %261 = vst.msk [vmem:[#allocation2 + $0x18] sm:$0xff] %vm257, 0.0
        %262 = vst.msk [vmem:[#allocation2 + $0x20] sm:$0xff] %vm257, 0.0
        %263 = vst.msk [vmem:[#allocation2 + $0x28] sm:$0xff] %vm257, 0.0
        %264 = vst.msk [vmem:[#allocation2 + $0x30] sm:$0xff] %vm257, 0.0
        %265 = vst.msk [vmem:[#allocation2 + $0x38] sm:$0xff] %vm257, 0.0
        %266 = vst.msk [vmem:[#allocation2 + $0x40] sm:$0xff] %vm257, 0.0
        %267 = vst.msk [vmem:[#allocation2 + $0x48] sm:$0xff] %vm257, 0.0
        %268 = vst.msk [vmem:[#allocation2 + $0x50] sm:$0xff] %vm257, 0.0
        %269 = vst.msk [vmem:[#allocation2 + $0x58] sm:$0xff] %vm257, 0.0
        %270 = vst.msk [vmem:[#allocation2 + $0x60] sm:$0xff] %vm257, 0.0
        %271 = vst.msk [vmem:[#allocation2 + $0x68] sm:$0xff] %vm257, 0.0
        %272 = vst.msk [vmem:[#allocation2 + $0x70] sm:$0xff] %vm257, 0.0
        %273 = vst.msk [vmem:[#allocation2 + $0x78] sm:$0xff] %vm257, 0.0
        %274 = vst.msk [vmem:[#allocation3] sm:$0xff] %vm257, 0.0
        %275 = vst.msk [vmem:[#allocation3 + $0x8] sm:$0xff] %vm257, 0.0
        %276 = vst.msk [vmem:[#allocation3 + $0x10] sm:$0xff] %vm257, 0.0
        %277 = vst.msk [vmem:[#allocation3 + $0x18] sm:$0xff] %vm257, 0.0
        %278 = vst.msk [vmem:[#allocation3 + $0x20] sm:$0xff] %vm257, 0.0
        %279 = vst.msk [vmem:[#allocation3 + $0x28] sm:$0xff] %vm257, 0.0
        %280 = vst.msk [vmem:[#allocation3 + $0x30] sm:$0xff] %vm257, 0.0
        %281 = vst.msk [vmem:[#allocation3 + $0x38] sm:$0xff] %vm257, 0.0
        %282 = vst.msk [vmem:[#allocation3 + $0x40] sm:$0xff] %vm257, 0.0
        %283 = vst.msk [vmem:[#allocation3 + $0x48] sm:$0xff] %vm257, 0.0
        %284 = vst.msk [vmem:[#allocation3 + $0x50] sm:$0xff] %vm257, 0.0
        %285 = vst.msk [vmem:[#allocation3 + $0x58] sm:$0xff] %vm257, 0.0
        %286 = vst.msk [vmem:[#allocation3 + $0x60] sm:$0xff] %vm257, 0.0
        %287 = vst.msk [vmem:[#allocation3 + $0x68] sm:$0xff] %vm257, 0.0
        %288 = vst.msk [vmem:[#allocation3 + $0x70] sm:$0xff] %vm257, 0.0
        %289 = vst.msk [vmem:[#allocation3 + $0x78] sm:$0xff] %vm257, 0.0
      $region44: #{tpu_custom_call.1} parent=39 // pred_fallthru
        _
      %v290 = vld [vmem:[%s1] sm:$0xff]
      %v291 = vld [vmem:[%s1 + $0x8] sm:$0xff]
      %v292 = vld [vmem:[%s1 + $0x10] sm:$0xff]
      %v293 = vld [vmem:[%s1 + $0x18] sm:$0xff]
      %v294 = vld [vmem:[%s1 + $0x20] sm:$0xff]
      %v295 = vld [vmem:[%s1 + $0x28] sm:$0xff]
      %v296 = vld [vmem:[%s1 + $0x30] sm:$0xff]
      %v297 = vld [vmem:[%s1 + $0x38] sm:$0xff]
      %v298 = vld [vmem:[%s246] sm:$0xff]
      %v299 = vld [vmem:[%s2] sm:$0xff]
      %v300 = vld [vmem:[%s2 + $0x8] sm:$0xff]
      %v301 = vld [vmem:[%s2 + $0x10] sm:$0xff]
      %v302 = vld [vmem:[%s2 + $0x18] sm:$0xff]
      %v303 = vld [vmem:[%s2 + $0x20] sm:$0xff]
      %v304 = vld [vmem:[%s2 + $0x28] sm:$0xff]
      %v305 = vld [vmem:[%s2 + $0x30] sm:$0xff]
      %v306 = vld [vmem:[%s2 + $0x38] sm:$0xff]
      %308 = vset.pattern.permute.xlu0 0
      %309 = vperm.xlu0 %308, %v299
      %v310 = vpop.permute.xlu0 %309
      %313 = vset.pattern.permute.xlu0 0
      %314 = vperm.xlu0 %313, %v300
      %v315 = vpop.permute.xlu0 %314
      %318 = vset.pattern.permute.xlu0 0
      %319 = vperm.xlu0 %318, %v301
      %v320 = vpop.permute.xlu0 %319
      %323 = vset.pattern.permute.xlu0 0
      %324 = vperm.xlu0 %323, %v302
      %v325 = vpop.permute.xlu0 %324
      %328 = vset.pattern.permute.xlu0 0
      %329 = vperm.xlu0 %328, %v303
      %v330 = vpop.permute.xlu0 %329
      %333 = vset.pattern.permute.xlu0 0
      %334 = vperm.xlu0 %333, %v304
      %v335 = vpop.permute.xlu0 %334
      %338 = vset.pattern.permute.xlu0 0
      %339 = vperm.xlu0 %338, %v305
      %v340 = vpop.permute.xlu0 %339
      %343 = vset.pattern.permute.xlu0 0
      %344 = vperm.xlu0 %343, %v306
      %v345 = vpop.permute.xlu0 %344
      %v348 = vcombine.high %v298, %v298
      %vm349 = vcmask 31744
      %v351 = vsel %vm349, %v290, 0
      %v354 = vsel %vm349, %v291, 0
      %v357 = vsel %vm349, %v292, 0
      %v360 = vsel %vm349, %v293, 0
      %v363 = vsel %vm349, %v294, 0
      %v366 = vsel %vm349, %v295, 0
      %v369 = vsel %vm349, %v296, 0
      %v372 = vsel %vm349, %v297, 0
      %vm374 = vcmask 1043456
      %v375 = vsel %vm374, %v298, 0
      %v377 = vsel %vm374, %v348, 0
      %379 = vmatprep.subr.mxu0 %v377
      %380 = vmatpush1.msra.mxu0 %v375
      %381 = vmatprep.subr.mxu0 0.0
      %382 = vmatpush1.msra.mxu0 0.0
      %383 = vmatprep.subr.mxu0 0.0
      %384 = vmatpush1.msra.mxu0 0.0
      %385 = vmatprep.subr.mxu0 0.0
      %386 = vmatpush1.msra.mxu0 0.0
      %387 = vmatprep.subr.mxu0 0.0
      %388 = vmatpush1.msra.mxu0 0.0
      %389 = vmatprep.subr.mxu0 0.0
      %390 = vmatpush1.msra.mxu0 0.0
      %391 = vmatprep.subr.mxu0 0.0
      %392 = vmatpush1.msra.mxu0 0.0
      %393 = vmatprep.subr.mxu0 0.0
      %394 = vmatpush1.msra.mxu0 0.0
      %395 = vmatprep.subr.mxu0 0.0
      %396 = vmatpush1.msra.mxu0 0.0
      %397 = vmatprep.subr.mxu0 0.0
      %398 = vmatpush1.msra.mxu0 0.0
      %399 = vmatprep.subr.mxu0 0.0
      %400 = vmatpush1.msra.mxu0 0.0
      %401 = vmatprep.subr.mxu0 0.0
      %402 = vmatpush1.msra.mxu0 0.0
      %403 = vmatprep.subr.mxu0 0.0
      %404 = vmatpush1.msra.mxu0 0.0
      %405 = vmatprep.subr.mxu0 0.0
      %406 = vmatpush1.msra.mxu0 0.0
      %407 = vmatprep.subr.mxu0 0.0
      %408 = vmatpush1.msra.mxu0 0.0
      %409 = vmatprep.subr.mxu0 0.0
      %410 = vmatpush1.msra.mxu0 0.0
      %411 = vmatprep.subr.mxu0 0.0
      %412 = vmatpush1.msra.mxu0 0.0
      %413 = vmatprep.subr.mxu0 0.0
      %414 = vmatpush1.msra.mxu0 0.0
      %415 = vmatprep.subr.mxu0 0.0
      %416 = vmatpush1.msra.mxu0 0.0
      %417 = vmatprep.subr.mxu0 0.0
      %418 = vmatpush1.msra.mxu0 0.0
      %419 = vmatprep.subr.mxu0 0.0
      %420 = vmatpush1.msra.mxu0 0.0
      %421 = vmatprep.subr.mxu0 0.0
      %422 = vmatpush1.msra.mxu0 0.0
      %423 = vmatprep.subr.mxu0 0.0
      %424 = vmatpush1.msra.mxu0 0.0
      %425 = vmatprep.subr.mxu0 0.0
      %426 = vmatpush1.msra.mxu0 0.0
      %427 = vmatprep.subr.mxu0 0.0
      %428 = vmatpush1.msra.mxu0 0.0
      %429 = vmatprep.subr.mxu0 0.0
      %430 = vmatpush1.msra.mxu0 0.0
      %431 = vmatprep.subr.mxu0 0.0
      %432 = vmatpush1.msra.mxu0 0.0
      %433 = vmatprep.subr.mxu0 0.0
      %434 = vmatpush1.msra.mxu0 0.0
      %435 = vmatprep.subr.mxu0 0.0
      %436 = vmatpush1.msra.mxu0 0.0
      %437 = vmatprep.subr.mxu0 0.0
      %438 = vmatpush1.msra.mxu0 0.0
      %439 = vmatprep.subr.mxu0 0.0
      %440 = vmatpush1.msra.mxu0 0.0
      %441 = vmatprep.subr.mxu0 0.0
      %442 = vmatpush1.msra.mxu0 0.0
      %443 = vmatprep.mubr.f32.mxu0 0.0
      %444 = vmatmul.mubr.f32.gmra.mrb[0].mxu0 %v351
      %v445 = vpop.f32.mrb[0].mxu0
      %v446 = vadd.f32 %v310, %v445
      %v447 = vpop.f32.mrb[0].mxu0
      %v448 = vadd.f32 %v310, %v447
      %449 = vmatprep.mubr.f32.mxu0 0.0
      %450 = vmatmul.mubr.f32.gmra.mrb[0].mxu0 %v354
      %v451 = vpop.f32.mrb[0].mxu0
      %v452 = vadd.f32 %v315, %v451
      %v453 = vpop.f32.mrb[0].mxu0
      %v454 = vadd.f32 %v315, %v453
      %455 = vmatprep.mubr.f32.mxu0 0.0
      %456 = vmatmul.mubr.f32.gmra.mrb[0].mxu0 %v357
      %v457 = vpop.f32.mrb[0].mxu0
      %v458 = vadd.f32 %v320, %v457
      %v459 = vpop.f32.mrb[0].mxu0
      %v460 = vadd.f32 %v320, %v459
      %461 = vmatprep.mubr.f32.mxu0 0.0
      %462 = vmatmul.mubr.f32.gmra.mrb[0].mxu0 %v360
      %v463 = vpop.f32.mrb[0].mxu0
      %v464 = vadd.f32 %v325, %v463
      %v465 = vpop.f32.mrb[0].mxu0
      %v466 = vadd.f32 %v325, %v465
      %467 = vmatprep.mubr.f32.mxu0 0.0
      %468 = vmatmul.mubr.f32.gmra.mrb[0].mxu0 %v363
      %v469 = vpop.f32.mrb[0].mxu0
      %v470 = vadd.f32 %v330, %v469
      %v471 = vpop.f32.mrb[0].mxu0
      %v472 = vadd.f32 %v330, %v471
      %473 = vmatprep.mubr.f32.mxu0 0.0
      %474 = vmatmul.mubr.f32.gmra.mrb[0].mxu0 %v366
      %v475 = vpop.f32.mrb[0].mxu0
      %v476 = vadd.f32 %v335, %v475
      %v477 = vpop.f32.mrb[0].mxu0
      %v478 = vadd.f32 %v335, %v477
      %479 = vmatprep.mubr.f32.mxu0 0.0
      %480 = vmatmul.mubr.f32.gmra.mrb[0].mxu0 %v369
      %v481 = vpop.f32.mrb[0].mxu0
      %v482 = vadd.f32 %v340, %v481
      %v483 = vpop.f32.mrb[0].mxu0
      %v484 = vadd.f32 %v340, %v483
      %485 = vmatprep.mubr.f32.mxu0 0.0
      %486 = vmatmul.mubr.f32.gmra.mrb[0].mxu0 %v372
      %v487 = vpop.f32.mrb[0].mxu0
      %v488 = vadd.f32 %v345, %v487
      %v489 = vpop.f32.mrb[0].mxu0
      %v490 = vadd.f32 %v345, %v489
      %491 = vdwg.mxu0
      %v492 = vmul.f32 %v446, 0.2
      %v493 = vmul.f32 %v448, 0.2
      %v494 = vmul.f32 %v452, 0.2
      %v495 = vmul.f32 %v454, 0.2
      %v496 = vmul.f32 %v458, 0.2
      %v497 = vmul.f32 %v460, 0.2
      %v498 = vmul.f32 %v464, 0.2
      %v499 = vmul.f32 %v466, 0.2
      %v500 = vmul.f32 %v470, 0.2
      %v501 = vmul.f32 %v472, 0.2
      %v502 = vmul.f32 %v476, 0.2
      %v503 = vmul.f32 %v478, 0.2
      %v504 = vmul.f32 %v482, 0.2
      %v505 = vmul.f32 %v484, 0.2
      %v506 = vmul.f32 %v488, 0.2
      %v507 = vmul.f32 %v490, 0.2
      %v508 = vmax.f32 %v446, %v492
      %v509 = vmax.f32 %v448, %v493
      %v510 = vmax.f32 %v452, %v494
      %v511 = vmax.f32 %v454, %v495
      %v512 = vmax.f32 %v458, %v496
      %v513 = vmax.f32 %v460, %v497
      %v514 = vmax.f32 %v464, %v498
      %v515 = vmax.f32 %v466, %v499
      %v516 = vmax.f32 %v470, %v500
      %v517 = vmax.f32 %v472, %v501
      %v518 = vmax.f32 %v476, %v502
      %v519 = vmax.f32 %v478, %v503
      %v520 = vmax.f32 %v482, %v504
      %v521 = vmax.f32 %v484, %v505
      %v522 = vmax.f32 %v488, %v506
      %v523 = vmax.f32 %v490, %v507
      %v524 = vld [vmem:[%s3] sm:$0xff]
      %v525 = vld [vmem:[%s3 + $0x8] sm:$0xff]
      %v526 = vld [vmem:[%s3 + $0x10] sm:$0xff]
      %v527 = vld [vmem:[%s3 + $0x18] sm:$0xff]
      %v528 = vld [vmem:[%s3 + $0x20] sm:$0xff]
      %v529 = vld [vmem:[%s3 + $0x28] sm:$0xff]
      %v530 = vld [vmem:[%s3 + $0x30] sm:$0xff]
      %v531 = vld [vmem:[%s3 + $0x38] sm:$0xff]
      %v532 = vld [vmem:[%s3 + $0x40] sm:$0xff]
      %v533 = vld [vmem:[%s3 + $0x48] sm:$0xff]
      %v534 = vld [vmem:[%s3 + $0x50] sm:$0xff]
      %v535 = vld [vmem:[%s3 + $0x58] sm:$0xff]
      %v536 = vld [vmem:[%s3 + $0x60] sm:$0xff]
      %v537 = vld [vmem:[%s3 + $0x68] sm:$0xff]
      %v538 = vld [vmem:[%s3 + $0x70] sm:$0xff]
      %v539 = vld [vmem:[%s3 + $0x78] sm:$0xff]
      %vm540 = vcmask 523264
      %v542 = vsel %vm540, %v524, 0
      %v545 = vsel %vm540, %v525, 0
      %v548 = vsel %vm540, %v526, 0
      %v551 = vsel %vm540, %v527, 0
      %v554 = vsel %vm540, %v528, 0
      %v557 = vsel %vm540, %v529, 0
      %v560 = vsel %vm540, %v530, 0
      %v563 = vsel %vm540, %v531, 0
      %v566 = vsel %vm540, %v532, 0
      %v569 = vsel %vm540, %v533, 0
      %v572 = vsel %vm540, %v534, 0
      %v575 = vsel %vm540, %v535, 0
      %v578 = vsel %vm540, %v536, 0
      %v581 = vsel %vm540, %v537, 0
      %v584 = vsel %vm540, %v538, 0
      %v587 = vsel %vm540, %v539, 0
      %589 = vmatprep.subr.mxu0 %v509
      %590 = vmatpush1.msra.mxu0 %v508
      %591 = vmatprep.subr.mxu0 %v511
      %592 = vmatpush1.msra.mxu0 %v510
      %593 = vmatprep.subr.mxu0 %v513
      %594 = vmatpush1.msra.mxu0 %v512
      %595 = vmatprep.subr.mxu0 %v515
      %596 = vmatpush1.msra.mxu0 %v514
      %597 = vmatprep.subr.mxu0 %v517
      %598 = vmatpush1.msra.mxu0 %v516
      %599 = vmatprep.subr.mxu0 %v519
      %600 = vmatpush1.msra.mxu0 %v518
      %601 = vmatprep.subr.mxu0 %v521
      %602 = vmatpush1.msra.mxu0 %v520
      %603 = vmatprep.subr.mxu0 %v523
      %604 = vmatpush1.msra.mxu0 %v522
      %605 = vmatprep.subr.mxu0 0.0
      %606 = vmatpush1.msra.mxu0 0.0
      %607 = vmatprep.subr.mxu0 0.0
      %608 = vmatpush1.msra.mxu0 0.0
      %609 = vmatprep.subr.mxu0 0.0
      %610 = vmatpush1.msra.mxu0 0.0
      %611 = vmatprep.subr.mxu0 0.0
      %612 = vmatpush1.msra.mxu0 0.0
      %613 = vmatprep.subr.mxu0 0.0
      %614 = vmatpush1.msra.mxu0 0.0
      %615 = vmatprep.subr.mxu0 0.0
      %616 = vmatpush1.msra.mxu0 0.0
      %617 = vmatprep.subr.mxu0 0.0
      %618 = vmatpush1.msra.mxu0 0.0
      %619 = vmatprep.subr.mxu0 0.0
      %620 = vmatpush1.msra.mxu0 0.0
      %621 = vmatprep.subr.mxu0 0.0
      %622 = vmatpush1.msra.mxu0 0.0
      %623 = vmatprep.subr.mxu0 0.0
      %624 = vmatpush1.msra.mxu0 0.0
      %625 = vmatprep.subr.mxu0 0.0
      %626 = vmatpush1.msra.mxu0 0.0
      %627 = vmatprep.subr.mxu0 0.0
      %628 = vmatpush1.msra.mxu0 0.0
      %629 = vmatprep.subr.mxu0 0.0
      %630 = vmatpush1.msra.mxu0 0.0
      %631 = vmatprep.subr.mxu0 0.0
      %632 = vmatpush1.msra.mxu0 0.0
      %633 = vmatprep.subr.mxu0 0.0
      %634 = vmatpush1.msra.mxu0 0.0
      %635 = vmatprep.subr.mxu0 0.0
      %636 = vmatpush1.msra.mxu0 0.0
      %637 = vmatprep.subr.mxu0 0.0
      %638 = vmatpush1.msra.mxu0 0.0
      %639 = vmatprep.subr.mxu0 0.0
      %640 = vmatpush1.msra.mxu0 0.0
      %641 = vmatprep.subr.mxu0 0.0
      %642 = vmatpush1.msra.mxu0 0.0
      %643 = vmatprep.subr.mxu0 0.0
      %644 = vmatpush1.msra.mxu0 0.0
      %645 = vmatprep.subr.mxu0 0.0
      %646 = vmatpush1.msra.mxu0 0.0
      %647 = vmatprep.subr.mxu0 0.0
      %648 = vmatpush1.msra.mxu0 0.0
      %649 = vmatprep.subr.mxu0 0.0
      %650 = vmatpush1.msra.mxu0 0.0
      %651 = vmatprep.subr.mxu0 0.0
      %652 = vmatpush1.msra.mxu0 0.0
      %653 = vmatprep.mubr.f32.mxu0 0.0
      %654 = vmatmul.mubr.f32.gmra.mrb[0].mxu0 %v542
      %v655 = vpop.f32.mrb[0].mxu0
      %v656 = vadd.f32 0.0, %v655
      %v657 = vpop.f32.mrb[0].mxu0
      %v658 = vadd.f32 0.0, %v657
      %659 = vmatprep.mubr.f32.mxu0 0.0
      %660 = vmatmul.mubr.f32.gmra.mrb[0].mxu0 %v545
      %v661 = vpop.f32.mrb[0].mxu0
      %v662 = vadd.f32 0.0, %v661
      %v663 = vpop.f32.mrb[0].mxu0
      %v664 = vadd.f32 0.0, %v663
      %665 = vmatprep.mubr.f32.mxu0 0.0
      %666 = vmatmul.mubr.f32.gmra.mrb[0].mxu0 %v548
      %v667 = vpop.f32.mrb[0].mxu0
      %v668 = vadd.f32 0.0, %v667
      %v669 = vpop.f32.mrb[0].mxu0
      %v670 = vadd.f32 0.0, %v669
      %671 = vmatprep.mubr.f32.mxu0 0.0
      %672 = vmatmul.mubr.f32.gmra.mrb[0].mxu0 %v551
      %v673 = vpop.f32.mrb[0].mxu0
      %v674 = vadd.f32 0.0, %v673
      %v675 = vpop.f32.mrb[0].mxu0
      %v676 = vadd.f32 0.0, %v675
      %677 = vmatprep.mubr.f32.mxu0 0.0
      %678 = vmatmul.mubr.f32.gmra.mrb[0].mxu0 %v554
      %v679 = vpop.f32.mrb[0].mxu0
      %v680 = vadd.f32 0.0, %v679
      %v681 = vpop.f32.mrb[0].mxu0
      %v682 = vadd.f32 0.0, %v681
      %683 = vmatprep.mubr.f32.mxu0 0.0
      %684 = vmatmul.mubr.f32.gmra.mrb[0].mxu0 %v557
      %v685 = vpop.f32.mrb[0].mxu0
      %v686 = vadd.f32 0.0, %v685
      %v687 = vpop.f32.mrb[0].mxu0
      %v688 = vadd.f32 0.0, %v687
      %689 = vmatprep.mubr.f32.mxu0 0.0
      %690 = vmatmul.mubr.f32.gmra.mrb[0].mxu0 %v560
      %v691 = vpop.f32.mrb[0].mxu0
      %v692 = vadd.f32 0.0, %v691
      %v693 = vpop.f32.mrb[0].mxu0
      %v694 = vadd.f32 0.0, %v693
      %695 = vmatprep.mubr.f32.mxu0 0.0
      %696 = vmatmul.mubr.f32.gmra.mrb[0].mxu0 %v563
      %v697 = vpop.f32.mrb[0].mxu0
      %v698 = vadd.f32 0.0, %v697
      %v699 = vpop.f32.mrb[0].mxu0
      %v700 = vadd.f32 0.0, %v699
      %701 = vmatprep.mubr.f32.mxu0 0.0
      %702 = vmatmul.mubr.f32.gmra.mrb[0].mxu0 %v566
      %v703 = vpop.f32.mrb[0].mxu0
      %v704 = vadd.f32 0.0, %v703
      %v705 = vpop.f32.mrb[0].mxu0
      %v706 = vadd.f32 0.0, %v705
      %707 = vmatprep.mubr.f32.mxu0 0.0
      %708 = vmatmul.mubr.f32.gmra.mrb[0].mxu0 %v569
      %v709 = vpop.f32.mrb[0].mxu0
      %v710 = vadd.f32 0.0, %v709
      %v711 = vpop.f32.mrb[0].mxu0
      %v712 = vadd.f32 0.0, %v711
      %713 = vmatprep.mubr.f32.mxu0 0.0
      %714 = vmatmul.mubr.f32.gmra.mrb[0].mxu0 %v572
      %v715 = vpop.f32.mrb[0].mxu0
      %v716 = vadd.f32 0.0, %v715
      %v717 = vpop.f32.mrb[0].mxu0
      %v718 = vadd.f32 0.0, %v717
      %719 = vmatprep.mubr.f32.mxu0 0.0
      %720 = vmatmul.mubr.f32.gmra.mrb[0].mxu0 %v575
      %v721 = vpop.f32.mrb[0].mxu0
      %v722 = vadd.f32 0.0, %v721
      %v723 = vpop.f32.mrb[0].mxu0
      %v724 = vadd.f32 0.0, %v723
      %725 = vmatprep.mubr.f32.mxu0 0.0
      %726 = vmatmul.mubr.f32.gmra.mrb[0].mxu0 %v578
      %v727 = vpop.f32.mrb[0].mxu0
      %v728 = vadd.f32 0.0, %v727
      %v729 = vpop.f32.mrb[0].mxu0
      %v730 = vadd.f32 0.0, %v729
      %731 = vmatprep.mubr.f32.mxu0 0.0
      %732 = vmatmul.mubr.f32.gmra.mrb[0].mxu0 %v581
      %v733 = vpop.f32.mrb[0].mxu0
      %v734 = vadd.f32 0.0, %v733
      %v735 = vpop.f32.mrb[0].mxu0
      %v736 = vadd.f32 0.0, %v735
      %737 = vmatprep.mubr.f32.mxu0 0.0
      %738 = vmatmul.mubr.f32.gmra.mrb[0].mxu0 %v584
      %v739 = vpop.f32.mrb[0].mxu0
      %v740 = vadd.f32 0.0, %v739
      %v741 = vpop.f32.mrb[0].mxu0
      %v742 = vadd.f32 0.0, %v741
      %743 = vmatprep.mubr.f32.mxu0 0.0
      %744 = vmatmul.mubr.f32.gmra.mrb[0].mxu0 %v587
      %v745 = vpop.f32.mrb[0].mxu0
      %v746 = vadd.f32 0.0, %v745
      %v747 = vpop.f32.mrb[0].mxu0
      %v748 = vadd.f32 0.0, %v747
      %749 = vdwg.mxu0
      %v750 = vld [vmem:[#allocation2] sm:$0xff]
      %v751 = vld [vmem:[#allocation2 + $0x8] sm:$0xff]
      %v752 = vld [vmem:[#allocation2 + $0x10] sm:$0xff]
      %v753 = vld [vmem:[#allocation2 + $0x18] sm:$0xff]
      %v754 = vld [vmem:[#allocation2 + $0x20] sm:$0xff]
      %v755 = vld [vmem:[#allocation2 + $0x28] sm:$0xff]
      %v756 = vld [vmem:[#allocation2 + $0x30] sm:$0xff]
      %v757 = vld [vmem:[#allocation2 + $0x38] sm:$0xff]
      %v758 = vld [vmem:[#allocation2 + $0x40] sm:$0xff]
      %v759 = vld [vmem:[#allocation2 + $0x48] sm:$0xff]
      %v760 = vld [vmem:[#allocation2 + $0x50] sm:$0xff]
      %v761 = vld [vmem:[#allocation2 + $0x58] sm:$0xff]
      %v762 = vld [vmem:[#allocation2 + $0x60] sm:$0xff]
      %v763 = vld [vmem:[#allocation2 + $0x68] sm:$0xff]
      %v764 = vld [vmem:[#allocation2 + $0x70] sm:$0xff]
      %v765 = vld [vmem:[#allocation2 + $0x78] sm:$0xff]
      %v766 = vld [vmem:[%s4] sm:$0xff]
      %v767 = vld [vmem:[%s4 + $0x8] sm:$0xff]
      %v768 = vld [vmem:[%s4 + $0x10] sm:$0xff]
      %v769 = vld [vmem:[%s4 + $0x18] sm:$0xff]
      %v770 = vld [vmem:[%s4 + $0x20] sm:$0xff]
      %v771 = vld [vmem:[%s4 + $0x28] sm:$0xff]
      %v772 = vld [vmem:[%s4 + $0x30] sm:$0xff]
      %v773 = vld [vmem:[%s4 + $0x38] sm:$0xff]
      %v774 = vld [vmem:[%s4 + $0x40] sm:$0xff]
      %v775 = vld [vmem:[%s4 + $0x48] sm:$0xff]
      %v776 = vld [vmem:[%s4 + $0x50] sm:$0xff]
      %v777 = vld [vmem:[%s4 + $0x58] sm:$0xff]
      %v778 = vld [vmem:[%s4 + $0x60] sm:$0xff]
      %v779 = vld [vmem:[%s4 + $0x68] sm:$0xff]
      %v780 = vld [vmem:[%s4 + $0x70] sm:$0xff]
      %v781 = vld [vmem:[%s4 + $0x78] sm:$0xff]
      %v782 = vld [vmem:[%s4 + $0x80] sm:$0xff]
      %v783 = vld [vmem:[%s4 + $0x88] sm:$0xff]
      %v784 = vld [vmem:[%s4 + $0x90] sm:$0xff]
      %v785 = vld [vmem:[%s4 + $0x98] sm:$0xff]
      %v786 = vld [vmem:[%s4 + $0xa0] sm:$0xff]
      %v787 = vld [vmem:[%s4 + $0xa8] sm:$0xff]
      %v788 = vld [vmem:[%s4 + $0xb0] sm:$0xff]
      %v789 = vld [vmem:[%s4 + $0xb8] sm:$0xff]
      %v790 = vld [vmem:[%s4 + $0xc0] sm:$0xff]
      %v791 = vld [vmem:[%s4 + $0xc8] sm:$0xff]
      %v792 = vld [vmem:[%s4 + $0xd0] sm:$0xff]
      %v793 = vld [vmem:[%s4 + $0xd8] sm:$0xff]
      %v794 = vld [vmem:[%s4 + $0xe0] sm:$0xff]
      %v795 = vld [vmem:[%s4 + $0xe8] sm:$0xff]
      %v796 = vld [vmem:[%s4 + $0xf0] sm:$0xff]
      %v797 = vld [vmem:[%s4 + $0xf8] sm:$0xff]
      %798 = vmatprep.subr.mxu0 0.0
      %799 = vmatpush1.msra.mxu0 %v766
      %800 = vmatprep.subr.mxu0 0.0
      %801 = vmatpush1.msra.mxu0 %v767
      %802 = vmatprep.subr.mxu0 0.0
      %803 = vmatpush1.msra.mxu0 %v768
      %804 = vmatprep.subr.mxu0 0.0
      %805 = vmatpush1.msra.mxu0 %v769
      %806 = vmatprep.subr.mxu0 0.0
      %807 = vmatpush1.msra.mxu0 %v770
      %808 = vmatprep.subr.mxu0 0.0
      %809 = vmatpush1.msra.mxu0 %v771
      %810 = vmatprep.subr.mxu0 0.0
      %811 = vmatpush1.msra.mxu0 %v772
      %812 = vmatprep.subr.mxu0 0.0
      %813 = vmatpush1.msra.mxu0 %v773
      %814 = vmatprep.subr.mxu0 0.0
      %815 = vmatpush1.msra.mxu0 %v774
      %816 = vmatprep.subr.mxu0 0.0
      %817 = vmatpush1.msra.mxu0 %v775
      %818 = vmatprep.subr.mxu0 0.0
      %819 = vmatpush1.msra.mxu0 %v776
      %820 = vmatprep.subr.mxu0 0.0
      %821 = vmatpush1.msra.mxu0 %v777
      %822 = vmatprep.subr.mxu0 0.0
      %823 = vmatpush1.msra.mxu0 %v778
      %824 = vmatprep.subr.mxu0 0.0
      %825 = vmatpush1.msra.mxu0 %v779
      %826 = vmatprep.subr.mxu0 0.0
      %827 = vmatpush1.msra.mxu0 %v780
      %828 = vmatprep.subr.mxu0 0.0
      %829 = vmatpush1.msra.mxu0 %v781
      %830 = vmatprep.subr.mxu0 0.0
      %831 = vmatpush1.msra.mxu0 %v782
      %832 = vmatprep.subr.mxu0 0.0
      %833 = vmatpush1.msra.mxu0 %v783
      %834 = vmatprep.subr.mxu0 0.0
      %835 = vmatpush1.msra.mxu0 %v784
      %836 = vmatprep.subr.mxu0 0.0
      %837 = vmatpush1.msra.mxu0 %v785
      %838 = vmatprep.subr.mxu0 0.0
      %839 = vmatpush1.msra.mxu0 %v786
      %840 = vmatprep.subr.mxu0 0.0
      %841 = vmatpush1.msra.mxu0 %v787
      %842 = vmatprep.subr.mxu0 0.0
      %843 = vmatpush1.msra.mxu0 %v788
      %844 = vmatprep.subr.mxu0 0.0
      %845 = vmatpush1.msra.mxu0 %v789
      %846 = vmatprep.subr.mxu0 0.0
      %847 = vmatpush1.msra.mxu0 %v790
      %848 = vmatprep.subr.mxu0 0.0
      %849 = vmatpush1.msra.mxu0 %v791
      %850 = vmatprep.subr.mxu0 0.0
      %851 = vmatpush1.msra.mxu0 %v792
      %852 = vmatprep.subr.mxu0 0.0
      %853 = vmatpush1.msra.mxu0 %v793
      %854 = vmatprep.subr.mxu0 0.0
      %855 = vmatpush1.msra.mxu0 %v794
      %856 = vmatprep.subr.mxu0 0.0
      %857 = vmatpush1.msra.mxu0 %v795
      %858 = vmatprep.subr.mxu0 0.0
      %859 = vmatpush1.msra.mxu0 %v796
      %860 = vmatprep.subr.mxu0 0.0
      %861 = vmatpush1.msra.mxu0 %v797
      %862 = vmatprep.mubr.f32.mxu0 %v658
      %863 = vmatmul.mubr.f32.gmra.mrb[0].mxu0 %v656
      %v864 = vpop.f32.mrb[0].mxu0
      %v865 = vadd.f32 0.0, %v864
      %v866 = vpop.f32.mrb[0].mxu0
      %867 = vmatprep.mubr.f32.mxu0 %v664
      %868 = vmatmul.mubr.f32.gmra.mrb[0].mxu0 %v662
      %v869 = vpop.f32.mrb[0].mxu0
      %v870 = vadd.f32 0.0, %v869
      %v871 = vpop.f32.mrb[0].mxu0
      %872 = vmatprep.mubr.f32.mxu0 %v670
      %873 = vmatmul.mubr.f32.gmra.mrb[0].mxu0 %v668
      %v874 = vpop.f32.mrb[0].mxu0
      %v875 = vadd.f32 0.0, %v874
      %v876 = vpop.f32.mrb[0].mxu0
      %877 = vmatprep.mubr.f32.mxu0 %v676
      %878 = vmatmul.mubr.f32.gmra.mrb[0].mxu0 %v674
      %v879 = vpop.f32.mrb[0].mxu0
      %v880 = vadd.f32 0.0, %v879
      %v881 = vpop.f32.mrb[0].mxu0
      %882 = vmatprep.mubr.f32.mxu0 %v682
      %883 = vmatmul.mubr.f32.gmra.mrb[0].mxu0 %v680
      %v884 = vpop.f32.mrb[0].mxu0
      %v885 = vadd.f32 0.0, %v884
      %v886 = vpop.f32.mrb[0].mxu0
      %887 = vmatprep.mubr.f32.mxu0 %v688
      %888 = vmatmul.mubr.f32.gmra.mrb[0].mxu0 %v686
      %v889 = vpop.f32.mrb[0].mxu0
      %v890 = vadd.f32 0.0, %v889
      %v891 = vpop.f32.mrb[0].mxu0
      %892 = vmatprep.mubr.f32.mxu0 %v694
      %893 = vmatmul.mubr.f32.gmra.mrb[0].mxu0 %v692
      %v894 = vpop.f32.mrb[0].mxu0
      %v895 = vadd.f32 0.0, %v894
      %v896 = vpop.f32.mrb[0].mxu0
      %897 = vmatprep.mubr.f32.mxu0 %v700
      %898 = vmatmul.mubr.f32.gmra.mrb[0].mxu0 %v698
      %v899 = vpop.f32.mrb[0].mxu0
      %v900 = vadd.f32 0.0, %v899
      %v901 = vpop.f32.mrb[0].mxu0
      %902 = vmatprep.mubr.f32.mxu0 %v706
      %903 = vmatmul.mubr.f32.gmra.mrb[0].mxu0 %v704
      %v904 = vpop.f32.mrb[0].mxu0
      %v905 = vadd.f32 0.0, %v904
      %v906 = vpop.f32.mrb[0].mxu0
      %907 = vmatprep.mubr.f32.mxu0 %v712
      %908 = vmatmul.mubr.f32.gmra.mrb[0].mxu0 %v710
      %v909 = vpop.f32.mrb[0].mxu0
      %v910 = vadd.f32 0.0, %v909
      %v911 = vpop.f32.mrb[0].mxu0
      %912 = vmatprep.mubr.f32.mxu0 %v718
      %913 = vmatmul.mubr.f32.gmra.mrb[0].mxu0 %v716
      %v914 = vpop.f32.mrb[0].mxu0
      %v915 = vadd.f32 0.0, %v914
      %v916 = vpop.f32.mrb[0].mxu0
      %917 = vmatprep.mubr.f32.mxu0 %v724
      %918 = vmatmul.mubr.f32.gmra.mrb[0].mxu0 %v722
      %v919 = vpop.f32.mrb[0].mxu0
      %v920 = vadd.f32 0.0, %v919
      %v921 = vpop.f32.mrb[0].mxu0
      %922 = vmatprep.mubr.f32.mxu0 %v730
      %923 = vmatmul.mubr.f32.gmra.mrb[0].mxu0 %v728
      %v924 = vpop.f32.mrb[0].mxu0
      %v925 = vadd.f32 0.0, %v924
      %v926 = vpop.f32.mrb[0].mxu0
      %927 = vmatprep.mubr.f32.mxu0 %v736
      %928 = vmatmul.mubr.f32.gmra.mrb[0].mxu0 %v734
      %v929 = vpop.f32.mrb[0].mxu0
      %v930 = vadd.f32 0.0, %v929
      %v931 = vpop.f32.mrb[0].mxu0
      %932 = vmatprep.mubr.f32.mxu0 %v742
      %933 = vmatmul.mubr.f32.gmra.mrb[0].mxu0 %v740
      %v934 = vpop.f32.mrb[0].mxu0
      %v935 = vadd.f32 0.0, %v934
      %v936 = vpop.f32.mrb[0].mxu0
      %937 = vmatprep.mubr.f32.mxu0 %v748
      %938 = vmatmul.mubr.f32.gmra.mrb[0].mxu0 %v746
      %v939 = vpop.f32.mrb[0].mxu0
      %v940 = vadd.f32 0.0, %v939
      %v941 = vpop.f32.mrb[0].mxu0
      %942 = vdwg.mxu0
      %v943 = vadd.f32 %v750, %v865
      %v944 = vadd.f32 %v751, %v870
      %v945 = vadd.f32 %v752, %v875
      %v946 = vadd.f32 %v753, %v880
      %v947 = vadd.f32 %v754, %v885
      %v948 = vadd.f32 %v755, %v890
      %v949 = vadd.f32 %v756, %v895
      %v950 = vadd.f32 %v757, %v900
      %v951 = vadd.f32 %v758, %v905
      %v952 = vadd.f32 %v759, %v910
      %v953 = vadd.f32 %v760, %v915
      %v954 = vadd.f32 %v761, %v920
      %v955 = vadd.f32 %v762, %v925
      %v956 = vadd.f32 %v763, %v930
      %v957 = vadd.f32 %v764, %v935
      %v958 = vadd.f32 %v765, %v940
      %vm959 = vcmask 7168
      %960 = vst.msk [vmem:[#allocation2] sm:$0xff] %vm959, %v943
      %961 = vst.msk [vmem:[#allocation2 + $0x8] sm:$0xff] %vm959, %v944
      %962 = vst.msk [vmem:[#allocation2 + $0x10] sm:$0xff] %vm959, %v945
      %963 = vst.msk [vmem:[#allocation2 + $0x18] sm:$0xff] %vm959, %v946
      %964 = vst.msk [vmem:[#allocation2 + $0x20] sm:$0xff] %vm959, %v947
      %965 = vst.msk [vmem:[#allocation2 + $0x28] sm:$0xff] %vm959, %v948
      %966 = vst.msk [vmem:[#allocation2 + $0x30] sm:$0xff] %vm959, %v949
      %967 = vst.msk [vmem:[#allocation2 + $0x38] sm:$0xff] %vm959, %v950
      %968 = vst.msk [vmem:[#allocation2 + $0x40] sm:$0xff] %vm959, %v951
      %969 = vst.msk [vmem:[#allocation2 + $0x48] sm:$0xff] %vm959, %v952
      %970 = vst.msk [vmem:[#allocation2 + $0x50] sm:$0xff] %vm959, %v953
      %971 = vst.msk [vmem:[#allocation2 + $0x58] sm:$0xff] %vm959, %v954
      %972 = vst.msk [vmem:[#allocation2 + $0x60] sm:$0xff] %vm959, %v955
      %973 = vst.msk [vmem:[#allocation2 + $0x68] sm:$0xff] %vm959, %v956
      %974 = vst.msk [vmem:[#allocation2 + $0x70] sm:$0xff] %vm959, %v957
      %975 = vst.msk [vmem:[#allocation2 + $0x78] sm:$0xff] %vm959, %v958
      %v976 = vld [vmem:[#allocation3] sm:$0xff]
      %v977 = vld [vmem:[#allocation3 + $0x8] sm:$0xff]
      %v978 = vld [vmem:[#allocation3 + $0x10] sm:$0xff]
      %v979 = vld [vmem:[#allocation3 + $0x18] sm:$0xff]
      %v980 = vld [vmem:[#allocation3 + $0x20] sm:$0xff]
      %v981 = vld [vmem:[#allocation3 + $0x28] sm:$0xff]
      %v982 = vld [vmem:[#allocation3 + $0x30] sm:$0xff]
      %v983 = vld [vmem:[#allocation3 + $0x38] sm:$0xff]
      %v984 = vld [vmem:[#allocation3 + $0x40] sm:$0xff]
      %v985 = vld [vmem:[#allocation3 + $0x48] sm:$0xff]
      %v986 = vld [vmem:[#allocation3 + $0x50] sm:$0xff]
      %v987 = vld [vmem:[#allocation3 + $0x58] sm:$0xff]
      %v988 = vld [vmem:[#allocation3 + $0x60] sm:$0xff]
      %v989 = vld [vmem:[#allocation3 + $0x68] sm:$0xff]
      %v990 = vld [vmem:[#allocation3 + $0x70] sm:$0xff]
      %v991 = vld [vmem:[#allocation3 + $0x78] sm:$0xff]
      %v992 = vmul.f32 %v656, %v656
      %v993 = vmul.f32 %v658, %v658
      %v994 = vmul.f32 %v662, %v662
      %v995 = vmul.f32 %v664, %v664
      %v996 = vmul.f32 %v668, %v668
      %v997 = vmul.f32 %v670, %v670
      %v998 = vmul.f32 %v674, %v674
      %v999 = vmul.f32 %v676, %v676
      %v1000 = vmul.f32 %v680, %v680
      %v1001 = vmul.f32 %v682, %v682
      %v1002 = vmul.f32 %v686, %v686
      %v1003 = vmul.f32 %v688, %v688
      %v1004 = vmul.f32 %v692, %v692
      %v1005 = vmul.f32 %v694, %v694
      %v1006 = vmul.f32 %v698, %v698
      %v1007 = vmul.f32 %v700, %v700
      %v1008 = vmul.f32 %v704, %v704
      %v1009 = vmul.f32 %v706, %v706
      %v1010 = vmul.f32 %v710, %v710
      %v1011 = vmul.f32 %v712, %v712
      %v1012 = vmul.f32 %v716, %v716
      %v1013 = vmul.f32 %v718, %v718
      %v1014 = vmul.f32 %v722, %v722
      %v1015 = vmul.f32 %v724, %v724
      %v1016 = vmul.f32 %v728, %v728
      %v1017 = vmul.f32 %v730, %v730
      %v1018 = vmul.f32 %v734, %v734
      %v1019 = vmul.f32 %v736, %v736
      %v1020 = vmul.f32 %v740, %v740
      %v1021 = vmul.f32 %v742, %v742
      %v1022 = vmul.f32 %v746, %v746
      %v1023 = vmul.f32 %v748, %v748
      %v1024 = vld [vmem:[%s4] sm:$0xff]
      %v1025 = vld [vmem:[%s4 + $0x8] sm:$0xff]
      %v1026 = vld [vmem:[%s4 + $0x10] sm:$0xff]
      %v1027 = vld [vmem:[%s4 + $0x18] sm:$0xff]
      %v1028 = vld [vmem:[%s4 + $0x20] sm:$0xff]
      %v1029 = vld [vmem:[%s4 + $0x28] sm:$0xff]
      %v1030 = vld [vmem:[%s4 + $0x30] sm:$0xff]
      %v1031 = vld [vmem:[%s4 + $0x38] sm:$0xff]
      %v1032 = vld [vmem:[%s4 + $0x40] sm:$0xff]
      %v1033 = vld [vmem:[%s4 + $0x48] sm:$0xff]
      %v1034 = vld [vmem:[%s4 + $0x50] sm:$0xff]
      %v1035 = vld [vmem:[%s4 + $0x58] sm:$0xff]
      %v1036 = vld [vmem:[%s4 + $0x60] sm:$0xff]
      %v1037 = vld [vmem:[%s4 + $0x68] sm:$0xff]
      %v1038 = vld [vmem:[%s4 + $0x70] sm:$0xff]
      %v1039 = vld [vmem:[%s4 + $0x78] sm:$0xff]
      %v1040 = vld [vmem:[%s4 + $0x80] sm:$0xff]
      %v1041 = vld [vmem:[%s4 + $0x88] sm:$0xff]
      %v1042 = vld [vmem:[%s4 + $0x90] sm:$0xff]
      %v1043 = vld [vmem:[%s4 + $0x98] sm:$0xff]
      %v1044 = vld [vmem:[%s4 + $0xa0] sm:$0xff]
      %v1045 = vld [vmem:[%s4 + $0xa8] sm:$0xff]
      %v1046 = vld [vmem:[%s4 + $0xb0] sm:$0xff]
      %v1047 = vld [vmem:[%s4 + $0xb8] sm:$0xff]
      %v1048 = vld [vmem:[%s4 + $0xc0] sm:$0xff]
      %v1049 = vld [vmem:[%s4 + $0xc8] sm:$0xff]
      %v1050 = vld [vmem:[%s4 + $0xd0] sm:$0xff]
      %v1051 = vld [vmem:[%s4 + $0xd8] sm:$0xff]
      %v1052 = vld [vmem:[%s4 + $0xe0] sm:$0xff]
      %v1053 = vld [vmem:[%s4 + $0xe8] sm:$0xff]
      %v1054 = vld [vmem:[%s4 + $0xf0] sm:$0xff]
      %v1055 = vld [vmem:[%s4 + $0xf8] sm:$0xff]
      %1056 = vmatprep.subr.mxu0 0.0
      %1057 = vmatpush1.msra.mxu0 %v1024
      %1058 = vmatprep.subr.mxu0 0.0
      %1059 = vmatpush1.msra.mxu0 %v1025
      %1060 = vmatprep.subr.mxu0 0.0
      %1061 = vmatpush1.msra.mxu0 %v1026
      %1062 = vmatprep.subr.mxu0 0.0
      %1063 = vmatpush1.msra.mxu0 %v1027
      %1064 = vmatprep.subr.mxu0 0.0
      %1065 = vmatpush1.msra.mxu0 %v1028
      %1066 = vmatprep.subr.mxu0 0.0
      %1067 = vmatpush1.msra.mxu0 %v1029
      %1068 = vmatprep.subr.mxu0 0.0
      %1069 = vmatpush1.msra.mxu0 %v1030
      %1070 = vmatprep.subr.mxu0 0.0
      %1071 = vmatpush1.msra.mxu0 %v1031
      %1072 = vmatprep.subr.mxu0 0.0
      %1073 = vmatpush1.msra.mxu0 %v1032
      %1074 = vmatprep.subr.mxu0 0.0
      %1075 = vmatpush1.msra.mxu0 %v1033
      %1076 = vmatprep.subr.mxu0 0.0
      %1077 = vmatpush1.msra.mxu0 %v1034
      %1078 = vmatprep.subr.mxu0 0.0
      %1079 = vmatpush1.msra.mxu0 %v1035
      %1080 = vmatprep.subr.mxu0 0.0
      %1081 = vmatpush1.msra.mxu0 %v1036
      %1082 = vmatprep.subr.mxu0 0.0
      %1083 = vmatpush1.msra.mxu0 %v1037
      %1084 = vmatprep.subr.mxu0 0.0
      %1085 = vmatpush1.msra.mxu0 %v1038
      %1086 = vmatprep.subr.mxu0 0.0
      %1087 = vmatpush1.msra.mxu0 %v1039
      %1088 = vmatprep.subr.mxu0 0.0
      %1089 = vmatpush1.msra.mxu0 %v1040
      %1090 = vmatprep.subr.mxu0 0.0
      %1091 = vmatpush1.msra.mxu0 %v1041
      %1092 = vmatprep.subr.mxu0 0.0
      %1093 = vmatpush1.msra.mxu0 %v1042
      %1094 = vmatprep.subr.mxu0 0.0
      %1095 = vmatpush1.msra.mxu0 %v1043
      %1096 = vmatprep.subr.mxu0 0.0
      %1097 = vmatpush1.msra.mxu0 %v1044
      %1098 = vmatprep.subr.mxu0 0.0
      %1099 = vmatpush1.msra.mxu0 %v1045
      %1100 = vmatprep.subr.mxu0 0.0
      %1101 = vmatpush1.msra.mxu0 %v1046
      %1102 = vmatprep.subr.mxu0 0.0
      %1103 = vmatpush1.msra.mxu0 %v1047
      %1104 = vmatprep.subr.mxu0 0.0
      %1105 = vmatpush1.msra.mxu0 %v1048
      %1106 = vmatprep.subr.mxu0 0.0
      %1107 = vmatpush1.msra.mxu0 %v1049
      %1108 = vmatprep.subr.mxu0 0.0
      %1109 = vmatpush1.msra.mxu0 %v1050
      %1110 = vmatprep.subr.mxu0 0.0
      %1111 = vmatpush1.msra.mxu0 %v1051
      %1112 = vmatprep.subr.mxu0 0.0
      %1113 = vmatpush1.msra.mxu0 %v1052
      %1114 = vmatprep.subr.mxu0 0.0
      %1115 = vmatpush1.msra.mxu0 %v1053
      %1116 = vmatprep.subr.mxu0 0.0
      %1117 = vmatpush1.msra.mxu0 %v1054
      %1118 = vmatprep.subr.mxu0 0.0
      %1119 = vmatpush1.msra.mxu0 %v1055
      %1120 = vmatprep.mubr.f32.mxu0 %v993
      %1121 = vmatmul.mubr.f32.gmra.mrb[0].mxu0 %v992
      %v1122 = vpop.f32.mrb[0].mxu0
      %v1123 = vadd.f32 0.0, %v1122
      %v1124 = vpop.f32.mrb[0].mxu0
      %1125 = vmatprep.mubr.f32.mxu0 %v995
      %1126 = vmatmul.mubr.f32.gmra.mrb[0].mxu0 %v994
      %v1127 = vpop.f32.mrb[0].mxu0
      %v1128 = vadd.f32 0.0, %v1127
      %v1129 = vpop.f32.mrb[0].mxu0
      %1130 = vmatprep.mubr.f32.mxu0 %v997
      %1131 = vmatmul.mubr.f32.gmra.mrb[0].mxu0 %v996
      %v1132 = vpop.f32.mrb[0].mxu0
      %v1133 = vadd.f32 0.0, %v1132
      %v1134 = vpop.f32.mrb[0].mxu0
      %1135 = vmatprep.mubr.f32.mxu0 %v999
      %1136 = vmatmul.mubr.f32.gmra.mrb[0].mxu0 %v998
      %v1137 = vpop.f32.mrb[0].mxu0
      %v1138 = vadd.f32 0.0, %v1137
      %v1139 = vpop.f32.mrb[0].mxu0
      %1140 = vmatprep.mubr.f32.mxu0 %v1001
      %1141 = vmatmul.mubr.f32.gmra.mrb[0].mxu0 %v1000
      %v1142 = vpop.f32.mrb[0].mxu0
      %v1143 = vadd.f32 0.0, %v1142
      %v1144 = vpop.f32.mrb[0].mxu0
      %1145 = vmatprep.mubr.f32.mxu0 %v1003
      %1146 = vmatmul.mubr.f32.gmra.mrb[0].mxu0 %v1002
      %v1147 = vpop.f32.mrb[0].mxu0
      %v1148 = vadd.f32 0.0, %v1147
      %v1149 = vpop.f32.mrb[0].mxu0
      %1150 = vmatprep.mubr.f32.mxu0 %v1005
      %1151 = vmatmul.mubr.f32.gmra.mrb[0].mxu0 %v1004
      %v1152 = vpop.f32.mrb[0].mxu0
      %v1153 = vadd.f32 0.0, %v1152
      %v1154 = vpop.f32.mrb[0].mxu0
      %1155 = vmatprep.mubr.f32.mxu0 %v1007
      %1156 = vmatmul.mubr.f32.gmra.mrb[0].mxu0 %v1006
      %v1157 = vpop.f32.mrb[0].mxu0
      %v1158 = vadd.f32 0.0, %v1157
      %v1159 = vpop.f32.mrb[0].mxu0
      %1160 = vmatprep.mubr.f32.mxu0 %v1009
      %1161 = vmatmul.mubr.f32.gmra.mrb[0].mxu0 %v1008
      %v1162 = vpop.f32.mrb[0].mxu0
      %v1163 = vadd.f32 0.0, %v1162
      %v1164 = vpop.f32.mrb[0].mxu0
      %1165 = vmatprep.mubr.f32.mxu0 %v1011
      %1166 = vmatmul.mubr.f32.gmra.mrb[0].mxu0 %v1010
      %v1167 = vpop.f32.mrb[0].mxu0
      %v1168 = vadd.f32 0.0, %v1167
      %v1169 = vpop.f32.mrb[0].mxu0
      %1170 = vmatprep.mubr.f32.mxu0 %v1013
      %1171 = vmatmul.mubr.f32.gmra.mrb[0].mxu0 %v1012
      %v1172 = vpop.f32.mrb[0].mxu0
      %v1173 = vadd.f32 0.0, %v1172
      %v1174 = vpop.f32.mrb[0].mxu0
      %1175 = vmatprep.mubr.f32.mxu0 %v1015
      %1176 = vmatmul.mubr.f32.gmra.mrb[0].mxu0 %v1014
      %v1177 = vpop.f32.mrb[0].mxu0
      %v1178 = vadd.f32 0.0, %v1177
      %v1179 = vpop.f32.mrb[0].mxu0
      %1180 = vmatprep.mubr.f32.mxu0 %v1017
      %1181 = vmatmul.mubr.f32.gmra.mrb[0].mxu0 %v1016
      %v1182 = vpop.f32.mrb[0].mxu0
      %v1183 = vadd.f32 0.0, %v1182
      %v1184 = vpop.f32.mrb[0].mxu0
      %1185 = vmatprep.mubr.f32.mxu0 %v1019
      %1186 = vmatmul.mubr.f32.gmra.mrb[0].mxu0 %v1018
      %v1187 = vpop.f32.mrb[0].mxu0
      %v1188 = vadd.f32 0.0, %v1187
      %v1189 = vpop.f32.mrb[0].mxu0
      %1190 = vmatprep.mubr.f32.mxu0 %v1021
      %1191 = vmatmul.mubr.f32.gmra.mrb[0].mxu0 %v1020
      %v1192 = vpop.f32.mrb[0].mxu0
      %v1193 = vadd.f32 0.0, %v1192
      %v1194 = vpop.f32.mrb[0].mxu0
      %1195 = vmatprep.mubr.f32.mxu0 %v1023
      %1196 = vmatmul.mubr.f32.gmra.mrb[0].mxu0 %v1022
      %v1197 = vpop.f32.mrb[0].mxu0
      %v1198 = vadd.f32 0.0, %v1197
      %v1199 = vpop.f32.mrb[0].mxu0
      %1200 = vdwg.mxu0
      %v1201 = vadd.f32 %v976, %v1123
      %v1202 = vadd.f32 %v977, %v1128
      %v1203 = vadd.f32 %v978, %v1133
      %v1204 = vadd.f32 %v979, %v1138
      %v1205 = vadd.f32 %v980, %v1143
      %v1206 = vadd.f32 %v981, %v1148
      %v1207 = vadd.f32 %v982, %v1153
      %v1208 = vadd.f32 %v983, %v1158
      %v1209 = vadd.f32 %v984, %v1163
      %v1210 = vadd.f32 %v985, %v1168
      %v1211 = vadd.f32 %v986, %v1173
      %v1212 = vadd.f32 %v987, %v1178
      %v1213 = vadd.f32 %v988, %v1183
      %v1214 = vadd.f32 %v989, %v1188
      %v1215 = vadd.f32 %v990, %v1193
      %v1216 = vadd.f32 %v991, %v1198
      %1217 = vst.msk [vmem:[#allocation3] sm:$0xff] %vm959, %v1201
      %1218 = vst.msk [vmem:[#allocation3 + $0x8] sm:$0xff] %vm959, %v1202
      %1219 = vst.msk [vmem:[#allocation3 + $0x10] sm:$0xff] %vm959, %v1203
      %1220 = vst.msk [vmem:[#allocation3 + $0x18] sm:$0xff] %vm959, %v1204
      %1221 = vst.msk [vmem:[#allocation3 + $0x20] sm:$0xff] %vm959, %v1205
      %1222 = vst.msk [vmem:[#allocation3 + $0x28] sm:$0xff] %vm959, %v1206
      %1223 = vst.msk [vmem:[#allocation3 + $0x30] sm:$0xff] %vm959, %v1207
      %1224 = vst.msk [vmem:[#allocation3 + $0x38] sm:$0xff] %vm959, %v1208
      %1225 = vst.msk [vmem:[#allocation3 + $0x40] sm:$0xff] %vm959, %v1209
      %1226 = vst.msk [vmem:[#allocation3 + $0x48] sm:$0xff] %vm959, %v1210
      %1227 = vst.msk [vmem:[#allocation3 + $0x50] sm:$0xff] %vm959, %v1211
      %1228 = vst.msk [vmem:[#allocation3 + $0x58] sm:$0xff] %vm959, %v1212
      %1229 = vst.msk [vmem:[#allocation3 + $0x60] sm:$0xff] %vm959, %v1213
      %1230 = vst.msk [vmem:[#allocation3 + $0x68] sm:$0xff] %vm959, %v1214
      %1231 = vst.msk [vmem:[#allocation3 + $0x70] sm:$0xff] %vm959, %v1215
      %1232 = vst.msk [vmem:[#allocation3 + $0x78] sm:$0xff] %vm959, %v1216
      // Predicated region
      $region45: #{tpu_custom_call.1} parent=39 // pred_check
        %p1233 = pneg %p253
      $region46: #{tpu_custom_call.1} parent=39 // pred_check_branch
        %1235 = sbr.rel (%p1233) target = $region48
      $region47: #{tpu_custom_call.1} parent=39 // pred_region
        %v1236 = vld [vmem:[#allocation2] sm:$0xff]
        %v1237 = vld [vmem:[#allocation2 + $0x8] sm:$0xff]
        %v1238 = vld [vmem:[#allocation2 + $0x10] sm:$0xff]
        %v1239 = vld [vmem:[#allocation2 + $0x18] sm:$0xff]
        %v1240 = vld [vmem:[#allocation2 + $0x20] sm:$0xff]
        %v1241 = vld [vmem:[#allocation2 + $0x28] sm:$0xff]
        %v1242 = vld [vmem:[#allocation2 + $0x30] sm:$0xff]
        %v1243 = vld [vmem:[#allocation2 + $0x38] sm:$0xff]
        %v1244 = vld [vmem:[#allocation2 + $0x40] sm:$0xff]
        %v1245 = vld [vmem:[#allocation2 + $0x48] sm:$0xff]
        %v1246 = vld [vmem:[#allocation2 + $0x50] sm:$0xff]
        %v1247 = vld [vmem:[#allocation2 + $0x58] sm:$0xff]
        %v1248 = vld [vmem:[#allocation2 + $0x60] sm:$0xff]
        %v1249 = vld [vmem:[#allocation2 + $0x68] sm:$0xff]
        %v1250 = vld [vmem:[#allocation2 + $0x70] sm:$0xff]
        %v1251 = vld [vmem:[#allocation2 + $0x78] sm:$0xff]
        %1252 = vst.msk [vmem:[%s252] sm:$0xff] %vm959, %v1236
        %1253 = vst.msk [vmem:[%s252 + $0x8] sm:$0xff] %vm959, %v1237
        %1254 = vst.msk [vmem:[%s252 + $0x10] sm:$0xff] %vm959, %v1238
        %1255 = vst.msk [vmem:[%s252 + $0x18] sm:$0xff] %vm959, %v1239
        %1256 = vst.msk [vmem:[%s252 + $0x20] sm:$0xff] %vm959, %v1240
        %1257 = vst.msk [vmem:[%s252 + $0x28] sm:$0xff] %vm959, %v1241
        %1258 = vst.msk [vmem:[%s252 + $0x30] sm:$0xff] %vm959, %v1242
        %1259 = vst.msk [vmem:[%s252 + $0x38] sm:$0xff] %vm959, %v1243
        %1260 = vst.msk [vmem:[%s252 + $0x40] sm:$0xff] %vm959, %v1244
        %1261 = vst.msk [vmem:[%s252 + $0x48] sm:$0xff] %vm959, %v1245
        %1262 = vst.msk [vmem:[%s252 + $0x50] sm:$0xff] %vm959, %v1246
        %1263 = vst.msk [vmem:[%s252 + $0x58] sm:$0xff] %vm959, %v1247
        %1264 = vst.msk [vmem:[%s252 + $0x60] sm:$0xff] %vm959, %v1248
        %1265 = vst.msk [vmem:[%s252 + $0x68] sm:$0xff] %vm959, %v1249
        %1266 = vst.msk [vmem:[%s252 + $0x70] sm:$0xff] %vm959, %v1250
        %1267 = vst.msk [vmem:[%s252 + $0x78] sm:$0xff] %vm959, %v1251
        %v1268 = vld [vmem:[#allocation3] sm:$0xff]
        %v1269 = vld [vmem:[#allocation3 + $0x8] sm:$0xff]
        %v1270 = vld [vmem:[#allocation3 + $0x10] sm:$0xff]
        %v1271 = vld [vmem:[#allocation3 + $0x18] sm:$0xff]
        %v1272 = vld [vmem:[#allocation3 + $0x20] sm:$0xff]
        %v1273 = vld [vmem:[#allocation3 + $0x28] sm:$0xff]
        %v1274 = vld [vmem:[#allocation3 + $0x30] sm:$0xff]
        %v1275 = vld [vmem:[#allocation3 + $0x38] sm:$0xff]
        %v1276 = vld [vmem:[#allocation3 + $0x40] sm:$0xff]
        %v1277 = vld [vmem:[#allocation3 + $0x48] sm:$0xff]
        %v1278 = vld [vmem:[#allocation3 + $0x50] sm:$0xff]
        %v1279 = vld [vmem:[#allocation3 + $0x58] sm:$0xff]
        %v1280 = vld [vmem:[#allocation3 + $0x60] sm:$0xff]
        %v1281 = vld [vmem:[#allocation3 + $0x68] sm:$0xff]
        %v1282 = vld [vmem:[#allocation3 + $0x70] sm:$0xff]
        %v1283 = vld [vmem:[#allocation3 + $0x78] sm:$0xff]
        %1300 = vrot.lane.b32.xlu0 %v1268, 1
        %v1301 = vpop.permute.xlu0 %1300
        %1302 = vrot.lane.b32.xlu0 %v1269, 1
        %v1303 = vpop.permute.xlu0 %1302
        %1304 = vrot.lane.b32.xlu0 %v1270, 1
        %v1305 = vpop.permute.xlu0 %1304
        %1306 = vrot.lane.b32.xlu0 %v1271, 1
        %v1307 = vpop.permute.xlu0 %1306
        %1308 = vrot.lane.b32.xlu0 %v1272, 1
        %v1309 = vpop.permute.xlu0 %1308
        %1310 = vrot.lane.b32.xlu0 %v1273, 1
        %v1311 = vpop.permute.xlu0 %1310
        %1312 = vrot.lane.b32.xlu0 %v1274, 1
        %v1313 = vpop.permute.xlu0 %1312
        %1314 = vrot.lane.b32.xlu0 %v1275, 1
        %v1315 = vpop.permute.xlu0 %1314
        %1316 = vrot.lane.b32.xlu0 %v1276, 1
        %v1317 = vpop.permute.xlu0 %1316
        %1318 = vrot.lane.b32.xlu0 %v1277, 1
        %v1319 = vpop.permute.xlu0 %1318
        %1320 = vrot.lane.b32.xlu0 %v1278, 1
        %v1321 = vpop.permute.xlu0 %1320
        %1322 = vrot.lane.b32.xlu0 %v1279, 1
        %v1323 = vpop.permute.xlu0 %1322
        %1324 = vrot.lane.b32.xlu0 %v1280, 1
        %v1325 = vpop.permute.xlu0 %1324
        %1326 = vrot.lane.b32.xlu0 %v1281, 1
        %v1327 = vpop.permute.xlu0 %1326
        %1328 = vrot.lane.b32.xlu0 %v1282, 1
        %v1329 = vpop.permute.xlu0 %1328
        %1330 = vrot.lane.b32.xlu0 %v1283, 1
        %v1331 = vpop.permute.xlu0 %1330
        %vm1348 = vcmask 15368
        %1349 = vst.msk [vmem:[%s252] sm:$0xff] %vm1348, %v1301
        %1350 = vst.msk [vmem:[%s252 + $0x8] sm:$0xff] %vm1348, %v1303
        %1351 = vst.msk [vmem:[%s252 + $0x10] sm:$0xff] %vm1348, %v1305
        %1352 = vst.msk [vmem:[%s252 + $0x18] sm:$0xff] %vm1348, %v1307
        %1353 = vst.msk [vmem:[%s252 + $0x20] sm:$0xff] %vm1348, %v1309
        %1354 = vst.msk [vmem:[%s252 + $0x28] sm:$0xff] %vm1348, %v1311
        %1355 = vst.msk [vmem:[%s252 + $0x30] sm:$0xff] %vm1348, %v1313
        %1356 = vst.msk [vmem:[%s252 + $0x38] sm:$0xff] %vm1348, %v1315
        %1357 = vst.msk [vmem:[%s252 + $0x40] sm:$0xff] %vm1348, %v1317
        %1358 = vst.msk [vmem:[%s252 + $0x48] sm:$0xff] %vm1348, %v1319
        %1359 = vst.msk [vmem:[%s252 + $0x50] sm:$0xff] %vm1348, %v1321
        %1360 = vst.msk [vmem:[%s252 + $0x58] sm:$0xff] %vm1348, %v1323
        %1361 = vst.msk [vmem:[%s252 + $0x60] sm:$0xff] %vm1348, %v1325
        %1362 = vst.msk [vmem:[%s252 + $0x68] sm:$0xff] %vm1348, %v1327
        %1363 = vst.msk [vmem:[%s252 + $0x70] sm:$0xff] %vm1348, %v1329
        %1364 = vst.msk [vmem:[%s252 + $0x78] sm:$0xff] %vm1348, %v1331
      $region48: #{tpu_custom_call.1} parent=39 // pred_fallthru
        _
      %p1365 = scmp.lt.s32.totalorder %s20, 1
      %s1366 = scalar_select %p1365, %s20, 1
      %s1367 = smul.addr %s1366, 16
      %s1368 = smul.addr %s1367, 8
      %s1369 = scalar_lea.vmem %s5, %s1368
      // Predicated region
      $region49: #{tpu_custom_call.1} parent=39 // pred_check
        %p1370 = pneg %p158
      $region50: #{tpu_custom_call.1} parent=39 // pred_check_branch
        %1372 = sbr.rel (%p1370) target = $region52
      $region51: #{tpu_custom_call.1} parent=39 // pred_region
        _
      $region52: #{tpu_custom_call.1} parent=39 // pred_fallthru
        _
    $region40: #{tpu_custom_call.1} parent=5 // pred_fallthru
      _
    %p1373 = scmp.le.s32.totalorder 2, %s11
    // Predicated region
    $region53: #{tpu_custom_call.1} parent=5 // pred_check
      %p1374 = pneg %p1373
    $region54: #{tpu_custom_call.1} parent=5 // pred_check_branch
      %1376 = sbr.rel (%p1374) target = $region56
    $region55: #{tpu_custom_call.1} parent=5 // pred_region
      %s1377 = ssub.s32 %s11, 2
      // Predicated region
      $region57: #{tpu_custom_call.1} parent=55 // pred_check
        %p1378 = pneg %p164
      $region58: #{tpu_custom_call.1} parent=55 // pred_check_branch
        %1380 = sbr.rel (%p1378) target = $region60
      $region59: #{tpu_custom_call.1} parent=55 // pred_region
        %p1381 = scmp.lt.s32.totalorder %s22, 1
        %s1382 = scalar_select %p1381, %s22, 1
        %s1383 = smul.addr %s1382, 16
        %s1384 = smul.addr %s1383, 8
        %s1385 = scalar_lea.vmem %s5, %s1384
      $region60: #{tpu_custom_call.1} parent=55 // pred_fallthru
        _
    $region56: #{tpu_custom_call.1} parent=5 // pred_fallthru
      _
  $region6: #{tpu_custom_call.1} parent=0 // loop_footer
    %s15 = sadd.s32 1, %s11
  $region7: #{tpu_custom_call.1} parent=0 // loop_footer_branch
    %10 = sbr.rel target = $region3
  $region8: #{tpu_custom_call.1} parent=0 // loop_exit
    _

</llo_original>
